<compile_context>
chip_gen: v6e
topology: v6e:2x2x1
jax: 0.10.0
libtpu: 0.0.40
codegen_flags: <defaults>
</compile_context>

<pallas_src>
import jax
import jax.numpy as jnp
import numpy as np
from jax import lax
from jax.experimental import pallas as pl
from jax.experimental.pallas import tpu as pltpu


# ----------------------------------------------------------------------------
# Fused Pallas kernel: conv1+BN1+ReLU -> conv2+BN2+ReLU for the whole batch
# in a single grid step (static unroll over images).
# ----------------------------------------------------------------------------
def encoder_block_kernel(x_ref, w1_ref, b1_ref, w2_ref, b2_ref, o_ref,
                         xpad_ref, ypad_ref):
    # x_ref:    (N, H, W*Cin)   f32 activations, channels packed in lanes
    # w1_ref:   (3, W*Cin, W*Cout)  bf16 banded conv1 weight, BN1 scale folded
    # b1_ref:   (1, W*Cout)     f32 BN1 shift, tiled across W
    # w2_ref:   (3, W*Cout, W*Cout) bf16 banded conv2 weight, BN2 scale folded
    # b2_ref:   (1, W*Cout)     f32 BN2 shift, tiled across W
    # o_ref:    (N, H, W*Cout)  f32 lane-dense output slab
    # xpad_ref: (H+2, W*Cin)    bf16 VMEM scratch (height halo, stage 1)
    # ypad_ref: (H+2, W*Cout)   bf16 VMEM scratch (height halo, stage 2)
    N = x_ref.shape[0]
    H = x_ref.shape[1]

    # Zero only the halo rows, once (never guarded by program_id: with
    # grid=(1,) there is a single step anyway, and parallel-core splits would
    # each need their own halo init).
    zero_row_x = jnp.zeros((1, xpad_ref.shape[1]), xpad_ref.dtype)
    zero_row_y = jnp.zeros((1, ypad_ref.shape[1]), ypad_ref.dtype)
    xpad_ref[0:1, :] = zero_row_x
    xpad_ref[H + 1:H + 2, :] = zero_row_x
    ypad_ref[0:1, :] = zero_row_y
    ypad_ref[H + 1:H + 2, :] = zero_row_y

    # Hoist small loads out of the image loop (JAX does not CSE broadcasts).
    b1 = b1_ref[...]
    b2 = b2_ref[...]

    for n in range(N):  # static unroll — whole batch in one grid step
        # ---- stage 1: conv3x3 (BN1 scale folded) -> +shift -> ReLU ----
        xb = x_ref[n].astype(xpad_ref.dtype)            # (H, W*Cin) bf16
        xpad_ref[1:H + 1, :] = xb                        # interior, written once
        acc = jnp.dot(xpad_ref[0:H, :], w1_ref[0],
                      preferred_element_type=jnp.float32)
        acc += jnp.dot(xb, w1_ref[1],                    # centre tap from regs
                       preferred_element_type=jnp.float32)
        acc += jnp.dot(xpad_ref[2:H + 2, :], w1_ref[2],
                       preferred_element_type=jnp.float32)
        y1 = jnp.maximum(acc + b1, 0.0)                  # f32

        # ---- stage 2: conv3x3 (BN2 scale folded) -> +shift -> ReLU ----
        yb = y1.astype(ypad_ref.dtype)                   # (H, W*Cout) bf16
        ypad_ref[1:H + 1, :] = yb
        acc2 = jnp.dot(ypad_ref[0:H, :], w2_ref[0],
                       preferred_element_type=jnp.float32)
        acc2 += jnp.dot(yb, w2_ref[1],
                        preferred_element_type=jnp.float32)
        acc2 += jnp.dot(ypad_ref[2:H + 2, :], w2_ref[2],
                        preferred_element_type=jnp.float32)
        o_ref[n] = jnp.maximum(acc2 + b2, 0.0)           # full-lane f32 store


def encoder_block_pallas(x_rows, w1_big, b1_tiled, w2_big, b2_tiled):
    N, H, WCin = x_rows.shape
    WCout = w1_big.shape[2]
    # Single grid step: per-step overhead and weight DMA paid exactly once.
    # (For this size, splitting N across v7x TensorCores would duplicate the
    #  weight DMA and launch overhead for a ~us body — keep it on one core.)
    return pl.pallas_call(
        encoder_block_kernel,
        out_shape=jax.ShapeDtypeStruct((N, H, WCout), jnp.float32),
        grid=(1,),
        in_specs=[
            pl.BlockSpec((N, H, WCin), lambda i: (0, 0, 0)),
            pl.BlockSpec(w1_big.shape, lambda i: (0, 0, 0)),
            pl.BlockSpec(b1_tiled.shape, lambda i: (0, 0)),
            pl.BlockSpec(w2_big.shape, lambda i: (0, 0, 0)),
            pl.BlockSpec(b2_tiled.shape, lambda i: (0, 0)),
        ],
        out_specs=pl.BlockSpec((N, H, WCout), lambda i: (0, 0, 0)),
        scratch_shapes=[
            pltpu.VMEM((H + 2, WCin), jnp.bfloat16),
            pltpu.VMEM((H + 2, WCout), jnp.bfloat16),
        ],
        compiler_params=pltpu.CompilerParams(
            dimension_semantics=("arbitrary",)),
    )(x_rows, w1_big, b1_tiled, w2_big, b2_tiled)


# ----------------------------------------------------------------------------
# Host-side parameter folding (numpy, done once) and forward wrappers
# ----------------------------------------------------------------------------
def fold_bn(gamma, beta, mean, var, eps=1e-5):
    """Eval-mode BatchNorm -> per-channel (scale, shift)."""
    scale = np.asarray(gamma) / np.sqrt(np.asarray(var) + eps)
    shift = np.asarray(beta) - np.asarray(mean) * scale
    return scale.astype(np.float32), shift.astype(np.float32)


def build_banded_weight(w_oihw, scale, W):
    """Torch conv weight (Cout,Cin,3,3) + folded BN scale
       -> (3, W*Cin, W*Cout) banded bf16 matmul weights (width padding built in).
       Hard-coded: stride=1, padding=1, 3x3 kernel, width W baked into shape."""
    w = np.asarray(w_oihw).astype(np.float32)
    s = np.asarray(scale).astype(np.float32).reshape(-1)
    Cout, Cin, KH, KW = w.shape
    assert KH == 3 and KW == 3, "banded weight builder assumes a 3x3 kernel"
    wt = np.transpose(w, (2, 3, 1, 0)) * s[None, None, None, :]  # (kh,kw,ci,co)
    big = np.zeros((KH, W * Cin, W * Cout), dtype=np.float32)
    for kh in range(KH):
        for col in range(W):            # output column
            for kw in range(KW):
                wi = col + kw - 1        # input column (padding = 1)
                if 0 <= wi < W:
                    big[kh, wi * Cin:(wi + 1) * Cin,
                        col * Cout:(col + 1) * Cout] = wt[kh, kw]
    return jnp.asarray(big, dtype=jnp.bfloat16)


def tile_shift(shift, W):
    return jnp.asarray(np.tile(np.asarray(shift, np.float32), W)[None, :])


def encoder_block_forward_rows(x_rows, params):
    """Fast path: lane-dense (N, H, W*Cin) in -> (N, H, W*Cout) out.
    No transpose kernels around the Pallas call."""
    assert x_rows.shape[2] == params["w1_big"].shape[1], (
        "width/channel layout baked into the banded weights does not match x")
    return encoder_block_pallas(x_rows, params["w1_big"], params["b1"],
                                params["w2_big"], params["b2"])


def encoder_block_forward_nchw(x_nchw, params, W):
    """Convenience wrapper for NCHW callers (pays two XLA transposes)."""
    N, Cin, H, _ = x_nchw.shape
    x_rows = jnp.transpose(x_nchw, (0, 2, 3, 1)).reshape(N, H, W * Cin)
    y_rows = encoder_block_forward_rows(x_rows, params)
    Cout = y_rows.shape[2] // W
    return jnp.transpose(y_rows.reshape(N, H, W, Cout), (0, 3, 1, 2))


# ----------------------------------------------------------------------------
# Pure-JAX reference (lax conv + raw BatchNorm formula) for verification
# ----------------------------------------------------------------------------
def reference_forward(x, w1, g1, beta1, m1, v1, w2, g2, beta2, m2, v2, eps):
    def bn(y, g, b, m, v):
        g = g.reshape(1, -1, 1, 1); b = b.reshape(1, -1, 1, 1)
        m = m.reshape(1, -1, 1, 1); v = v.reshape(1, -1, 1, 1)
        return g * (y - m) / jnp.sqrt(v + eps) + b

    dn = lax.conv_dimension_numbers(x.shape, w1.shape, ("NCHW", "OIHW", "NCHW"))
    y = lax.conv_general_dilated(x, w1, (1, 1), "SAME", dimension_numbers=dn)
    y = jnp.maximum(bn(y, g1, beta1, m1, v1), 0.0)
    dn2 = lax.conv_dimension_numbers(y.shape, w2.shape, ("NCHW", "OIHW", "NCHW"))
    y = lax.conv_general_dilated(y, w2, (1, 1), "SAME", dimension_numbers=dn2)
    y = jnp.maximum(bn(y, g2, beta2, m2, v2), 0.0)
    return y


# ----------------------------------------------------------------------------
# Main
# ----------------------------------------------------------------------------
if __name__ == "__main__":
    key = jax.random.PRNGKey(0)
    kx, k1, k2, kg1, kb1, km1, kv1, kg2, kb2, km2, kv2 = jax.random.split(key, 11)

    N, Cin, H, W = 2, 4, 16, 16
    Cout = 8
    eps = 1e-5

    x = jax.random.normal(kx, (N, Cin, H, W), dtype=jnp.float32)

    # Conv weights in torch (Cout, Cin, 3, 3) convention, bias=False.
    w1_oihw = 0.1 * jax.random.normal(k1, (Cout, Cin, 3, 3), dtype=jnp.float32)
    w2_oihw = 0.1 * jax.random.normal(k2, (Cout, Cout, 3, 3), dtype=jnp.float32)

    # Deterministic BatchNorm parameters / running statistics (eval mode).
    g1 = 1.0 + 0.1 * jax.random.normal(kg1, (Cout,), dtype=jnp.float32)
    b1 = 0.1 * jax.random.normal(kb1, (Cout,), dtype=jnp.float32)
    m1 = 0.1 * jax.random.normal(km1, (Cout,), dtype=jnp.float32)
    v1 = 0.5 + jnp.abs(jax.random.normal(kv1, (Cout,), dtype=jnp.float32)) * 0.5
    g2 = 1.0 + 0.1 * jax.random.normal(kg2, (Cout,), dtype=jnp.float32)
    b2 = 0.1 * jax.random.normal(kb2, (Cout,), dtype=jnp.float32)
    m2 = 0.1 * jax.random.normal(km2, (Cout,), dtype=jnp.float32)
    v2 = 0.5 + jnp.abs(jax.random.normal(kv2, (Cout,), dtype=jnp.float32)) * 0.5

    scale1, shift1 = fold_bn(g1, b1, m1, v1, eps)
    scale2, shift2 = fold_bn(g2, b2, m2, v2, eps)

    params = {
        "w1_big": build_banded_weight(w1_oihw, scale1, W),   # bf16
        "w2_big": build_banded_weight(w2_oihw, scale2, W),   # bf16
        "b1": tile_shift(shift1, W),                         # f32
        "b2": tile_shift(shift2, W),                         # f32
    }

    # Fast path: layout conversion done once outside the kernel call; the
    # Pallas kernel consumes/produces the lane-dense (N, H, W*C) layout.
    x_rows = jnp.transpose(x, (0, 2, 3, 1)).reshape(N, H, W * Cin)

    out_rows = jax.jit(encoder_block_forward_rows)(x_rows, params)
    out_rows = jax.block_until_ready(out_rows)

    ref = reference_forward(x, w1_oihw, g1, b1, m1, v1,
                            w2_oihw, g2, b2, m2, v2, eps)
    ref = jax.block_until_ready(ref)
    ref_rows = jnp.transpose(ref, (0, 2, 3, 1)).reshape(N, H, W * Cout)

    assert out_rows.shape == (N, H, W * Cout), out_rows.shape
    # bf16 weights/activations on the MXU with f32 accumulation: compare with
    # a bf16-aware tolerance against the exact f32 reference.
    np.testing.assert_allclose(np.asarray(out_rows), np.asarray(ref_rows),
                               rtol=2e-2, atol=2e-2)
    print("KERNEL_OK")
</pallas_src>

<mosaic_0001>
module attributes {stable_mosaic.version = 11 : i64} {
  func.func @encoder_block_kernel(%arg0: i32, %arg1: memref<2x16x64xf32, #tpu.memory_space<vmem>>, %arg2: memref<3x64x128xbf16, #tpu.memory_space<vmem>>, %arg3: memref<1x128xf32, #tpu.memory_space<vmem>>, %arg4: memref<3x128x128xbf16, #tpu.memory_space<vmem>>, %arg5: memref<1x128xf32, #tpu.memory_space<vmem>>, %arg6: memref<2x16x128xf32, #tpu.memory_space<vmem>>, %arg7: memref<18x64xbf16, #tpu.memory_space<vmem>>, %arg8: memref<18x128xbf16, #tpu.memory_space<vmem>>) attributes {dimension_semantics = [#tpu.dimension_semantics<arbitrary>], iteration_bounds = array<i64: 1>, scalar_prefetch = 0 : i64, scratch_operands = 2 : i64, tpu.core_type = #tpu.core_type<tc>, window_params = [{pipeline_mode = #tpu.pipeline_mode<synchronous>, transform_indices = @transform_0, window_bounds = array<i64: 2, 16, 64>}, {pipeline_mode = #tpu.pipeline_mode<synchronous>, transform_indices = @transform_1, window_bounds = array<i64: 3, 64, 128>}, {pipeline_mode = #tpu.pipeline_mode<synchronous>, transform_indices = @transform_2, window_bounds = array<i64: 1, 128>}, {pipeline_mode = #tpu.pipeline_mode<synchronous>, transform_indices = @transform_3, window_bounds = array<i64: 3, 128, 128>}, {pipeline_mode = #tpu.pipeline_mode<synchronous>, transform_indices = @transform_4, window_bounds = array<i64: 1, 128>}, {pipeline_mode = #tpu.pipeline_mode<synchronous>, transform_indices = @transform_5, window_bounds = array<i64: 2, 16, 128>}]} {
    %cst = arith.constant 0.000000e+00 : bf16
    %0 = vector.broadcast %cst : bf16 to vector<1x64xbf16>
    %cst_0 = arith.constant 0.000000e+00 : bf16
    %1 = vector.broadcast %cst_0 : bf16 to vector<1x128xbf16>
    %c0 = arith.constant 0 : index
    %c0_1 = arith.constant 0 : index
    %2 = vector.load %arg7[%c0, %c0_1] : memref<18x64xbf16, #tpu.memory_space<vmem>>, vector<1x64xbf16>
    tpu.vector_store %arg7[%c0, %c0_1], %0 {strides = array<i32>} : memref<18x64xbf16, #tpu.memory_space<vmem>>, vector<1x64xbf16>,
    %c17 = arith.constant 17 : index
    %c0_2 = arith.constant 0 : index
    %3 = vector.load %arg7[%c17, %c0_2] : memref<18x64xbf16, #tpu.memory_space<vmem>>, vector<1x64xbf16>
    tpu.vector_store %arg7[%c17, %c0_2], %0 {strides = array<i32>} : memref<18x64xbf16, #tpu.memory_space<vmem>>, vector<1x64xbf16>,
    %c0_3 = arith.constant 0 : index
    %c0_4 = arith.constant 0 : index
    %4 = vector.load %arg8[%c0_3, %c0_4] : memref<18x128xbf16, #tpu.memory_space<vmem>>, vector<1x128xbf16>
    tpu.vector_store %arg8[%c0_3, %c0_4], %1 {strides = array<i32>} : memref<18x128xbf16, #tpu.memory_space<vmem>>, vector<1x128xbf16>,
    %c17_5 = arith.constant 17 : index
    %c0_6 = arith.constant 0 : index
    %5 = vector.load %arg8[%c17_5, %c0_6] : memref<18x128xbf16, #tpu.memory_space<vmem>>, vector<1x128xbf16>
    tpu.vector_store %arg8[%c17_5, %c0_6], %1 {strides = array<i32>} : memref<18x128xbf16, #tpu.memory_space<vmem>>, vector<1x128xbf16>,
    %c0_7 = arith.constant 0 : index
    %c0_8 = arith.constant 0 : index
    %6 = vector.load %arg3[%c0_7, %c0_8] : memref<1x128xf32, #tpu.memory_space<vmem>>, vector<1x128xf32>
    %c0_9 = arith.constant 0 : index
    %c0_10 = arith.constant 0 : index
    %7 = vector.load %arg5[%c0_9, %c0_10] : memref<1x128xf32, #tpu.memory_space<vmem>>, vector<1x128xf32>
    %c0_11 = arith.constant 0 : index
    %c0_12 = arith.constant 0 : index
    %c0_13 = arith.constant 0 : index
    %8 = vector.load %arg1[%c0_11, %c0_12, %c0_13] : memref<2x16x64xf32, #tpu.memory_space<vmem>>, vector<1x16x64xf32>
    %9 = vector.shape_cast %8 : vector<1x16x64xf32> to vector<16x64xf32>
    %10 = arith.truncf %9 : vector<16x64xf32> to vector<16x64xbf16>
    %c1 = arith.constant 1 : index
    %c0_14 = arith.constant 0 : index
    %11 = vector.load %arg7[%c1, %c0_14] : memref<18x64xbf16, #tpu.memory_space<vmem>>, vector<16x64xbf16>
    tpu.vector_store %arg7[%c1, %c0_14], %10 {strides = array<i32>} : memref<18x64xbf16, #tpu.memory_space<vmem>>, vector<16x64xbf16>,
    %c0_15 = arith.constant 0 : index
    %c0_16 = arith.constant 0 : index
    %12 = vector.load %arg7[%c0_15, %c0_16] : memref<18x64xbf16, #tpu.memory_space<vmem>>, vector<16x64xbf16>
    %c0_17 = arith.constant 0 : index
    %c0_18 = arith.constant 0 : index
    %c0_19 = arith.constant 0 : index
    %13 = vector.load %arg2[%c0_17, %c0_18, %c0_19] : memref<3x64x128xbf16, #tpu.memory_space<vmem>>, vector<1x64x128xbf16>
    %14 = vector.shape_cast %13 : vector<1x64x128xbf16> to vector<64x128xbf16>
    %cst_20 = arith.constant dense<0.000000e+00> : vector<16x128xf32>
    %15 = tpu.matmul %12, %14, %cst_20 {dimension_numbers = #tpu.dot_dimension_numbers<[1], [0], [0], [1], [0, 0, 1, 1], [], []>} : vector<16x64xbf16>, vector<64x128xbf16>, vector<16x128xf32> -> vector<16x128xf32>
    %c1_21 = arith.constant 1 : index
    %c0_22 = arith.constant 0 : index
    %c0_23 = arith.constant 0 : index
    %16 = vector.load %arg2[%c1_21, %c0_22, %c0_23] : memref<3x64x128xbf16, #tpu.memory_space<vmem>>, vector<1x64x128xbf16>
    %17 = vector.shape_cast %16 : vector<1x64x128xbf16> to vector<64x128xbf16>
    %cst_24 = arith.constant dense<0.000000e+00> : vector<16x128xf32>
    %18 = tpu.matmul %10, %17, %cst_24 {dimension_numbers = #tpu.dot_dimension_numbers<[1], [0], [0], [1], [0, 0, 1, 1], [], []>} : vector<16x64xbf16>, vector<64x128xbf16>, vector<16x128xf32> -> vector<16x128xf32>
    %19 = arith.addf %15, %18 : vector<16x128xf32>
    %c2 = arith.constant 2 : index
    %c0_25 = arith.constant 0 : index
    %20 = vector.load %arg7[%c2, %c0_25] : memref<18x64xbf16, #tpu.memory_space<vmem>>, vector<16x64xbf16>
    %c2_26 = arith.constant 2 : index
    %c0_27 = arith.constant 0 : index
    %c0_28 = arith.constant 0 : index
    %21 = vector.load %arg2[%c2_26, %c0_27, %c0_28] : memref<3x64x128xbf16, #tpu.memory_space<vmem>>, vector<1x64x128xbf16>
    %22 = vector.shape_cast %21 : vector<1x64x128xbf16> to vector<64x128xbf16>
    %cst_29 = arith.constant dense<0.000000e+00> : vector<16x128xf32>
    %23 = tpu.matmul %20, %22, %cst_29 {dimension_numbers = #tpu.dot_dimension_numbers<[1], [0], [0], [1], [0, 0, 1, 1], [], []>} : vector<16x64xbf16>, vector<64x128xbf16>, vector<16x128xf32> -> vector<16x128xf32>
    %24 = arith.addf %19, %23 : vector<16x128xf32>
    %25 = vector.broadcast %6 : vector<1x128xf32> to vector<16x128xf32>
    %26 = arith.addf %24, %25 : vector<16x128xf32>
    %cst_30 = arith.constant 0.000000e+00 : f32
    %27 = vector.broadcast %cst_30 : f32 to vector<16x128xf32>
    %28 = arith.maximumf %26, %27 : vector<16x128xf32>
    %29 = arith.truncf %28 : vector<16x128xf32> to vector<16x128xbf16>
    %c1_31 = arith.constant 1 : index
    %c0_32 = arith.constant 0 : index
    %30 = vector.load %arg8[%c1_31, %c0_32] : memref<18x128xbf16, #tpu.memory_space<vmem>>, vector<16x128xbf16>
    tpu.vector_store %arg8[%c1_31, %c0_32], %29 {strides = array<i32>} : memref<18x128xbf16, #tpu.memory_space<vmem>>, vector<16x128xbf16>,
    %c0_33 = arith.constant 0 : index
    %c0_34 = arith.constant 0 : index
    %31 = vector.load %arg8[%c0_33, %c0_34] : memref<18x128xbf16, #tpu.memory_space<vmem>>, vector<16x128xbf16>
    %c0_35 = arith.constant 0 : index
    %c0_36 = arith.constant 0 : index
    %c0_37 = arith.constant 0 : index
    %32 = vector.load %arg4[%c0_35, %c0_36, %c0_37] : memref<3x128x128xbf16, #tpu.memory_space<vmem>>, vector<1x128x128xbf16>
    %33 = vector.shape_cast %32 : vector<1x128x128xbf16> to vector<128x128xbf16>
    %cst_38 = arith.constant dense<0.000000e+00> : vector<16x128xf32>
    %34 = tpu.matmul %31, %33, %cst_38 {dimension_numbers = #tpu.dot_dimension_numbers<[1], [0], [0], [1], [0, 0, 1, 1], [], []>} : vector<16x128xbf16>, vector<128x128xbf16>, vector<16x128xf32> -> vector<16x128xf32>
    %c1_39 = arith.constant 1 : index
    %c0_40 = arith.constant 0 : index
    %c0_41 = arith.constant 0 : index
    %35 = vector.load %arg4[%c1_39, %c0_40, %c0_41] : memref<3x128x128xbf16, #tpu.memory_space<vmem>>, vector<1x128x128xbf16>
    %36 = vector.shape_cast %35 : vector<1x128x128xbf16> to vector<128x128xbf16>
    %cst_42 = arith.constant dense<0.000000e+00> : vector<16x128xf32>
    %37 = tpu.matmul %29, %36, %cst_42 {dimension_numbers = #tpu.dot_dimension_numbers<[1], [0], [0], [1], [0, 0, 1, 1], [], []>} : vector<16x128xbf16>, vector<128x128xbf16>, vector<16x128xf32> -> vector<16x128xf32>
    %38 = arith.addf %34, %37 : vector<16x128xf32>
    %c2_43 = arith.constant 2 : index
    %c0_44 = arith.constant 0 : index
    %39 = vector.load %arg8[%c2_43, %c0_44] : memref<18x128xbf16, #tpu.memory_space<vmem>>, vector<16x128xbf16>
    %c2_45 = arith.constant 2 : index
    %c0_46 = arith.constant 0 : index
    %c0_47 = arith.constant 0 : index
    %40 = vector.load %arg4[%c2_45, %c0_46, %c0_47] : memref<3x128x128xbf16, #tpu.memory_space<vmem>>, vector<1x128x128xbf16>
    %41 = vector.shape_cast %40 : vector<1x128x128xbf16> to vector<128x128xbf16>
    %cst_48 = arith.constant dense<0.000000e+00> : vector<16x128xf32>
    %42 = tpu.matmul %39, %41, %cst_48 {dimension_numbers = #tpu.dot_dimension_numbers<[1], [0], [0], [1], [0, 0, 1, 1], [], []>} : vector<16x128xbf16>, vector<128x128xbf16>, vector<16x128xf32> -> vector<16x128xf32>
    %43 = arith.addf %38, %42 : vector<16x128xf32>
    %44 = vector.broadcast %7 : vector<1x128xf32> to vector<16x128xf32>
    %45 = arith.addf %43, %44 : vector<16x128xf32>
    %cst_49 = arith.constant 0.000000e+00 : f32
    %46 = vector.broadcast %cst_49 : f32 to vector<16x128xf32>
    %47 = arith.maximumf %45, %46 : vector<16x128xf32>
    %c0_50 = arith.constant 0 : index
    %c0_51 = arith.constant 0 : index
    %c0_52 = arith.constant 0 : index
    %48 = vector.load %arg6[%c0_50, %c0_51, %c0_52] : memref<2x16x128xf32, #tpu.memory_space<vmem>>, vector<1x16x128xf32>
    %49 = vector.shape_cast %48 : vector<1x16x128xf32> to vector<16x128xf32>
    %50 = vector.shape_cast %47 : vector<16x128xf32> to vector<1x16x128xf32>
    tpu.vector_store %arg6[%c0_50, %c0_51, %c0_52], %50 {strides = array<i32>} : memref<2x16x128xf32, #tpu.memory_space<vmem>>, vector<1x16x128xf32>,
    %c1_53 = arith.constant 1 : index
    %c0_54 = arith.constant 0 : index
    %c0_55 = arith.constant 0 : index
    %51 = vector.load %arg1[%c1_53, %c0_54, %c0_55] : memref<2x16x64xf32, #tpu.memory_space<vmem>>, vector<1x16x64xf32>
    %52 = vector.shape_cast %51 : vector<1x16x64xf32> to vector<16x64xf32>
    %53 = arith.truncf %52 : vector<16x64xf32> to vector<16x64xbf16>
    %c1_56 = arith.constant 1 : index
    %c0_57 = arith.constant 0 : index
    %54 = vector.load %arg7[%c1_56, %c0_57] : memref<18x64xbf16, #tpu.memory_space<vmem>>, vector<16x64xbf16>
    tpu.vector_store %arg7[%c1_56, %c0_57], %53 {strides = array<i32>} : memref<18x64xbf16, #tpu.memory_space<vmem>>, vector<16x64xbf16>,
    %c0_58 = arith.constant 0 : index
    %c0_59 = arith.constant 0 : index
    %55 = vector.load %arg7[%c0_58, %c0_59] : memref<18x64xbf16, #tpu.memory_space<vmem>>, vector<16x64xbf16>
    %c0_60 = arith.constant 0 : index
    %c0_61 = arith.constant 0 : index
    %c0_62 = arith.constant 0 : index
    %56 = vector.load %arg2[%c0_60, %c0_61, %c0_62] : memref<3x64x128xbf16, #tpu.memory_space<vmem>>, vector<1x64x128xbf16>
    %57 = vector.shape_cast %56 : vector<1x64x128xbf16> to vector<64x128xbf16>
    %cst_63 = arith.constant dense<0.000000e+00> : vector<16x128xf32>
    %58 = tpu.matmul %55, %57, %cst_63 {dimension_numbers = #tpu.dot_dimension_numbers<[1], [0], [0], [1], [0, 0, 1, 1], [], []>} : vector<16x64xbf16>, vector<64x128xbf16>, vector<16x128xf32> -> vector<16x128xf32>
    %c1_64 = arith.constant 1 : index
    %c0_65 = arith.constant 0 : index
    %c0_66 = arith.constant 0 : index
    %59 = vector.load %arg2[%c1_64, %c0_65, %c0_66] : memref<3x64x128xbf16, #tpu.memory_space<vmem>>, vector<1x64x128xbf16>
    %60 = vector.shape_cast %59 : vector<1x64x128xbf16> to vector<64x128xbf16>
    %cst_67 = arith.constant dense<0.000000e+00> : vector<16x128xf32>
    %61 = tpu.matmul %53, %60, %cst_67 {dimension_numbers = #tpu.dot_dimension_numbers<[1], [0], [0], [1], [0, 0, 1, 1], [], []>} : vector<16x64xbf16>, vector<64x128xbf16>, vector<16x128xf32> -> vector<16x128xf32>
    %62 = arith.addf %58, %61 : vector<16x128xf32>
    %c2_68 = arith.constant 2 : index
    %c0_69 = arith.constant 0 : index
    %63 = vector.load %arg7[%c2_68, %c0_69] : memref<18x64xbf16, #tpu.memory_space<vmem>>, vector<16x64xbf16>
    %c2_70 = arith.constant 2 : index
    %c0_71 = arith.constant 0 : index
    %c0_72 = arith.constant 0 : index
    %64 = vector.load %arg2[%c2_70, %c0_71, %c0_72] : memref<3x64x128xbf16, #tpu.memory_space<vmem>>, vector<1x64x128xbf16>
    %65 = vector.shape_cast %64 : vector<1x64x128xbf16> to vector<64x128xbf16>
    %cst_73 = arith.constant dense<0.000000e+00> : vector<16x128xf32>
    %66 = tpu.matmul %63, %65, %cst_73 {dimension_numbers = #tpu.dot_dimension_numbers<[1], [0], [0], [1], [0, 0, 1, 1], [], []>} : vector<16x64xbf16>, vector<64x128xbf16>, vector<16x128xf32> -> vector<16x128xf32>
    %67 = arith.addf %62, %66 : vector<16x128xf32>
    %68 = vector.broadcast %6 : vector<1x128xf32> to vector<16x128xf32>
    %69 = arith.addf %67, %68 : vector<16x128xf32>
    %cst_74 = arith.constant 0.000000e+00 : f32
    %70 = vector.broadcast %cst_74 : f32 to vector<16x128xf32>
    %71 = arith.maximumf %69, %70 : vector<16x128xf32>
    %72 = arith.truncf %71 : vector<16x128xf32> to vector<16x128xbf16>
    %c1_75 = arith.constant 1 : index
    %c0_76 = arith.constant 0 : index
    %73 = vector.load %arg8[%c1_75, %c0_76] : memref<18x128xbf16, #tpu.memory_space<vmem>>, vector<16x128xbf16>
    tpu.vector_store %arg8[%c1_75, %c0_76], %72 {strides = array<i32>} : memref<18x128xbf16, #tpu.memory_space<vmem>>, vector<16x128xbf16>,
    %c0_77 = arith.constant 0 : index
    %c0_78 = arith.constant 0 : index
    %74 = vector.load %arg8[%c0_77, %c0_78] : memref<18x128xbf16, #tpu.memory_space<vmem>>, vector<16x128xbf16>
    %c0_79 = arith.constant 0 : index
    %c0_80 = arith.constant 0 : index
    %c0_81 = arith.constant 0 : index
    %75 = vector.load %arg4[%c0_79, %c0_80, %c0_81] : memref<3x128x128xbf16, #tpu.memory_space<vmem>>, vector<1x128x128xbf16>
    %76 = vector.shape_cast %75 : vector<1x128x128xbf16> to vector<128x128xbf16>
    %cst_82 = arith.constant dense<0.000000e+00> : vector<16x128xf32>
    %77 = tpu.matmul %74, %76, %cst_82 {dimension_numbers = #tpu.dot_dimension_numbers<[1], [0], [0], [1], [0, 0, 1, 1], [], []>} : vector<16x128xbf16>, vector<128x128xbf16>, vector<16x128xf32> -> vector<16x128xf32>
    %c1_83 = arith.constant 1 : index
    %c0_84 = arith.constant 0 : index
    %c0_85 = arith.constant 0 : index
    %78 = vector.load %arg4[%c1_83, %c0_84, %c0_85] : memref<3x128x128xbf16, #tpu.memory_space<vmem>>, vector<1x128x128xbf16>
    %79 = vector.shape_cast %78 : vector<1x128x128xbf16> to vector<128x128xbf16>
    %cst_86 = arith.constant dense<0.000000e+00> : vector<16x128xf32>
    %80 = tpu.matmul %72, %79, %cst_86 {dimension_numbers = #tpu.dot_dimension_numbers<[1], [0], [0], [1], [0, 0, 1, 1], [], []>} : vector<16x128xbf16>, vector<128x128xbf16>, vector<16x128xf32> -> vector<16x128xf32>
    %81 = arith.addf %77, %80 : vector<16x128xf32>
    %c2_87 = arith.constant 2 : index
    %c0_88 = arith.constant 0 : index
    %82 = vector.load %arg8[%c2_87, %c0_88] : memref<18x128xbf16, #tpu.memory_space<vmem>>, vector<16x128xbf16>
    %c2_89 = arith.constant 2 : index
    %c0_90 = arith.constant 0 : index
    %c0_91 = arith.constant 0 : index
    %83 = vector.load %arg4[%c2_89, %c0_90, %c0_91] : memref<3x128x128xbf16, #tpu.memory_space<vmem>>, vector<1x128x128xbf16>
    %84 = vector.shape_cast %83 : vector<1x128x128xbf16> to vector<128x128xbf16>
    %cst_92 = arith.constant dense<0.000000e+00> : vector<16x128xf32>
    %85 = tpu.matmul %82, %84, %cst_92 {dimension_numbers = #tpu.dot_dimension_numbers<[1], [0], [0], [1], [0, 0, 1, 1], [], []>} : vector<16x128xbf16>, vector<128x128xbf16>, vector<16x128xf32> -> vector<16x128xf32>
    %86 = arith.addf %81, %85 : vector<16x128xf32>
    %87 = vector.broadcast %7 : vector<1x128xf32> to vector<16x128xf32>
    %88 = arith.addf %86, %87 : vector<16x128xf32>
    %cst_93 = arith.constant 0.000000e+00 : f32
    %89 = vector.broadcast %cst_93 : f32 to vector<16x128xf32>
    %90 = arith.maximumf %88, %89 : vector<16x128xf32>
    %c1_94 = arith.constant 1 : index
    %c0_95 = arith.constant 0 : index
    %c0_96 = arith.constant 0 : index
    %91 = vector.load %arg6[%c1_94, %c0_95, %c0_96] : memref<2x16x128xf32, #tpu.memory_space<vmem>>, vector<1x16x128xf32>
    %92 = vector.shape_cast %91 : vector<1x16x128xf32> to vector<16x128xf32>
    %93 = vector.shape_cast %90 : vector<16x128xf32> to vector<1x16x128xf32>
    tpu.vector_store %arg6[%c1_94, %c0_95, %c0_96], %93 {strides = array<i32>} : memref<2x16x128xf32, #tpu.memory_space<vmem>>, vector<1x16x128xf32>,
    return
  }
  func.func @transform_0(%arg0: i32) -> (i32, i32, i32) {
    %c0_i32 = arith.constant 0 : i32
    %c0_i32_0 = arith.constant 0 : i32
    %c0_i32_1 = arith.constant 0 : i32
    %c0_i32_2 = arith.constant 0 : i32
    return %c0_i32, %c0_i32_0, %c0_i32_1 : i32, i32, i32
  }
  func.func @transform_1(%arg0: i32) -> (i32, i32, i32) {
    %c0_i32 = arith.constant 0 : i32
    %c0_i32_0 = arith.constant 0 : i32
    %c0_i32_1 = arith.constant 0 : i32
    %c0_i32_2 = arith.constant 0 : i32
    return %c0_i32, %c0_i32_0, %c0_i32_1 : i32, i32, i32
  }
  func.func @transform_2(%arg0: i32) -> (i32, i32) {
    %c0_i32 = arith.constant 0 : i32
    %c0_i32_0 = arith.constant 0 : i32
    %c0_i32_1 = arith.constant 0 : i32
    return %c0_i32, %c0_i32_0 : i32, i32
  }
  func.func @transform_3(%arg0: i32) -> (i32, i32, i32) {
    %c0_i32 = arith.constant 0 : i32
    %c0_i32_0 = arith.constant 0 : i32
    %c0_i32_1 = arith.constant 0 : i32
    %c0_i32_2 = arith.constant 0 : i32
    return %c0_i32, %c0_i32_0, %c0_i32_1 : i32, i32, i32
  }
  func.func @transform_4(%arg0: i32) -> (i32, i32) {
    %c0_i32 = arith.constant 0 : i32
    %c0_i32_0 = arith.constant 0 : i32
    %c0_i32_1 = arith.constant 0 : i32
    return %c0_i32, %c0_i32_0 : i32, i32
  }
  func.func @transform_5(%arg0: i32) -> (i32, i32, i32) {
    %c0_i32 = arith.constant 0 : i32
    %c0_i32_0 = arith.constant 0 : i32
    %c0_i32_1 = arith.constant 0 : i32
    %c0_i32_2 = arith.constant 0 : i32
    return %c0_i32, %c0_i32_0, %c0_i32_1 : i32, i32, i32
  }
}

</mosaic_0001>

<llo_original>
// kernel: encoder_block_forward_rows.1
$region0: #{encoder_block_forward_rows.1}
  #allocation0 [shape = 'u32[]', space=smem, size = 0x4, offset = 0x4, fixed_abs, tag = 'smem constant byte address 0x4 - core index']
  #allocation1 [shape = 'u32[144,128]{1,0:T(1,128)}', space=vmem, size = 0x12000, scoped, tag = 'internal scratch']
  #allocation2 [shape = 'bf16[18,64]{1,0:T(8,128)(2,1)}', space=vmem, size = 0x1800, scoped, tag = 'scratch operand']
  #allocation3 [shape = 'bf16[18,128]{1,0:T(8,128)(2,1)}', space=vmem, size = 0x1800, scoped, tag = 'scratch operand']
  %s0 = inlined_call_operand.hbm [shape: f32[2,16,64], index: 0, kind: input, shape index: {}]
  %s1 = inlined_call_operand.hbm [shape: bf16[3,64,128], index: 1, kind: input, shape index: {}]
  %s2 = inlined_call_operand.vmem [shape: f32[1,128], index: 2, kind: input, shape index: {}]
  %s3 = inlined_call_operand.hbm [shape: bf16[3,128,128], index: 3, kind: input, shape index: {}]
  %s4 = inlined_call_operand.vmem [shape: f32[1,128], index: 4, kind: input, shape index: {}]
  %s5 = inlined_call_operand.hbm [shape: f32[2,16,128], index: 5, kind: output, shape index: {}]
  %s6 = sld [smem:[#allocation0]]
  $region42: #{encoder_block_forward_rows.1} parent=0
    _
  %s8 = ssub.s32 1, %s6
  %s9 = scalar_select 0, %s8, %s6
  $region1: #{encoder_block_forward_rows.1} parent=0
    #allocation4 [shape = 'u8[16384]{0}', space=vmem, size = 0x4000, scoped, tag = 'input window, operand 0, single buffered']
    #allocation5 [shape = 's32[1]{0}', space=sflag, size = 0x4, scoped, tag = 'scoped memory for encoder_block_forward_rows.1']
    #allocation6 [shape = 's32[1]{0}', space=sflag, size = 0x4, scoped, tag = 'scoped memory for encoder_block_forward_rows.1']
    #allocation7 [shape = 'u8[49152]{0}', space=vmem, size = 0xc000, scoped, tag = 'input window, operand 1, single buffered']
    #allocation8 [shape = 's32[1]{0}', space=sflag, size = 0x4, scoped, tag = 'scoped memory for encoder_block_forward_rows.1']
    #allocation9 [shape = 'u8[98304]{0}', space=vmem, size = 0x18000, scoped, tag = 'input window, operand 3, single buffered']
    #allocation10 [shape = 'u8[16384]{0}', space=vmem, size = 0x4000, scoped, tag = 'output window, operand 0, single buffered']
    %10 = vsyncpa [#allocation5], 0
    %11 = vsyncpa [#allocation8], 0
    %12 = vsyncpa [#allocation6], 0
    // Predicated region
    $region2: #{encoder_block_forward_rows.1} parent=1 // pred_check
      _
    $region3: #{encoder_block_forward_rows.1} parent=1 // pred_check_branch
      %14 = sbr.rel (0) target = $region5
    $region4: #{encoder_block_forward_rows.1} parent=1 // pred_region
      %s16 = ssub.s32 512, 512
      %17 = vsyncadd [#allocation5], %s16
      %s18 = sshll.u32 [#allocation4], 4
      %s19 = int_to_ptr.vmem [resolvable:$true] %s18
      %24 = dma.hbm_to_vmem [thread:$0]  %s0, 512, %s19, [#allocation5], 128, 128, 8
    $region5: #{encoder_block_forward_rows.1} parent=1 // pred_fallthru
      _
    // Predicated region
    $region6: #{encoder_block_forward_rows.1} parent=1 // pred_check
      _
    $region7: #{encoder_block_forward_rows.1} parent=1 // pred_check_branch
      %26 = sbr.rel (0) target = $region9
    $region8: #{encoder_block_forward_rows.1} parent=1 // pred_region
      %s28 = ssub.s32 1536, 1536
      %29 = vsyncadd [#allocation8], %s28
      %s30 = sshll.u32 [#allocation7], 4
      %s31 = int_to_ptr.vmem [resolvable:$true] %s30
      %36 = dma.hbm_to_vmem [thread:$0]  %s1, 1536, %s31, [#allocation8], 64, 64, 4
    $region9: #{encoder_block_forward_rows.1} parent=1 // pred_fallthru
      _
    // Predicated region
    $region10: #{encoder_block_forward_rows.1} parent=1 // pred_check
      _
    $region11: #{encoder_block_forward_rows.1} parent=1 // pred_check_branch
      %38 = sbr.rel (0) target = $region13
    $region12: #{encoder_block_forward_rows.1} parent=1 // pred_region
      _
    $region13: #{encoder_block_forward_rows.1} parent=1 // pred_fallthru
      _
    // Predicated region
    $region14: #{encoder_block_forward_rows.1} parent=1 // pred_check
      _
    $region15: #{encoder_block_forward_rows.1} parent=1 // pred_check_branch
      %40 = sbr.rel (0) target = $region17
    $region16: #{encoder_block_forward_rows.1} parent=1 // pred_region
      %s42 = ssub.s32 3072, 3072
      %43 = vsyncadd [#allocation8], %s42
      %s44 = sshll.u32 [#allocation9], 4
      %s45 = int_to_ptr.vmem [resolvable:$true] %s44
      %50 = dma.hbm_to_vmem [thread:$0]  %s3, 3072, %s45, [#allocation8], 64, 64, 4
    $region17: #{encoder_block_forward_rows.1} parent=1 // pred_fallthru
      _
    // Predicated region
    $region18: #{encoder_block_forward_rows.1} parent=1 // pred_check
      _
    $region19: #{encoder_block_forward_rows.1} parent=1 // pred_check_branch
      %52 = sbr.rel (0) target = $region21
    $region20: #{encoder_block_forward_rows.1} parent=1 // pred_region
      _
    $region21: #{encoder_block_forward_rows.1} parent=1 // pred_fallthru
      _
    // Predicated region
    $region22: #{encoder_block_forward_rows.1} parent=1 // pred_check
      _
    $region23: #{encoder_block_forward_rows.1} parent=1 // pred_check_branch
      %54 = sbr.rel (0) target = $region25
    $region24: #{encoder_block_forward_rows.1} parent=1 // pred_region
      %55 = dma.done [#allocation5], 512
    $region25: #{encoder_block_forward_rows.1} parent=1 // pred_fallthru
      _
    // Predicated region
    $region26: #{encoder_block_forward_rows.1} parent=1 // pred_check
      _
    $region27: #{encoder_block_forward_rows.1} parent=1 // pred_check_branch
      %57 = sbr.rel (0) target = $region29
    $region28: #{encoder_block_forward_rows.1} parent=1 // pred_region
      %58 = dma.done [#allocation8], 1536
    $region29: #{encoder_block_forward_rows.1} parent=1 // pred_fallthru
      _
    // Predicated region
    $region30: #{encoder_block_forward_rows.1} parent=1 // pred_check
      _
    $region31: #{encoder_block_forward_rows.1} parent=1 // pred_check_branch
      %60 = sbr.rel (0) target = $region33
    $region32: #{encoder_block_forward_rows.1} parent=1 // pred_region
      %61 = dma.done [#allocation8], 3072
    $region33: #{encoder_block_forward_rows.1} parent=1 // pred_fallthru
      _
    %vm63 = vcmask 516096
    %vm64 = vsmask.f32 256
    %vm65 = vmand %vm63, %vm64
    %v66 = vld [vmem:[#allocation2] sm:$0x1]
    %v67 = vsel %vm65, 0, %v66
    %68 = vst [vmem:[#allocation2] sm:$0x1] %v67
    %vm69 = vsmask.f32 7938
    %vm70 = vmand %vm63, %vm69
    %v71 = vld [vmem:[#allocation2 + $0x8] sm:$0x1]
    %v72 = vsel %vm70, 0, %v71
    %73 = vst [vmem:[#allocation2 + $0x8] sm:$0x1] %v72
    %vm74 = vcmask 1040384
    %vm75 = vmand %vm74, %vm64
    %v76 = vld [vmem:[#allocation3] sm:$0x1]
    %v77 = vsel %vm75, 0, %v76
    %78 = vst [vmem:[#allocation3] sm:$0x1] %v77
    %vm79 = vmand %vm74, %vm69
    %v80 = vld [vmem:[#allocation3 + $0x8] sm:$0x1]
    %v81 = vsel %vm79, 0, %v80
    %82 = vst [vmem:[#allocation3 + $0x8] sm:$0x1] %v81
    %v83 = vld [vmem:[%s2] sm:$0x1]
    %v84 = vld [vmem:[%s4] sm:$0x1]
    %v85 = vld [vmem:[#allocation4] sm:$0xff]
    %v86 = vld [vmem:[#allocation4 + $0x8] sm:$0xff]
    %v87 = vpack.c.bf16 %v86, %v85
    %v89 = vunpack.c.l.b16 %v87
    %v90 = vunpack.c.h.b16 %v87
    %v91 = vpack.c.b16 %v89, %v89
    %v92 = vpack.c.b16 %v90, %v90
    %vm93 = vsmask.f32 4368
    %vm94 = vmor %vm64, %vm93
    %v96 = vshrl.u32 %v91, 16
    %v98 = vrot.slane %v96, 7
    %v99 = vshll.u32 %v91, 16
    %v101 = vor.u32 %v98, %v99
    %v102 = vrot.slane %v98, 4
    %v104 = vshrl.u32 %v92, 16
    %v106 = vrot.slane %v104, 7
    %v107 = vshll.u32 %v92, 16
    %v109 = vor.u32 %v106, %v107
    %v110 = vsel %vm94, %v102, %v109
    %v111 = vrot.slane %v106, 4
    %vm115 = vcmask 519168
    %vm116 = vmand %vm115, %vm69
    %v117 = vld [vmem:[#allocation2] sm:$0xf]
    %v118 = vsel %vm116, %v101, %v117
    %119 = vst [vmem:[#allocation2] sm:$0xf] %v118
    %vm120 = vcmask 519168
    %121 = vst.msk [vmem:[#allocation2 + $0x4] sm:$0xf] %vm120, %v110
    %v122 = vld [vmem:[#allocation2 + $0x8] sm:$0x1]
    %v123 = vsel %vm65, %v111, %v122
    %124 = vst [vmem:[#allocation2 + $0x8] sm:$0x1] %v123
    %v125 = vld [vmem:[#allocation2] sm:$0xf]
    %v126 = vld [vmem:[#allocation2 + $0x4] sm:$0xf]
    %v127 = vld [vmem:[#allocation7] sm:$0xf]
    %v128 = vld [vmem:[#allocation7 + $0x4] sm:$0xf]
    %v129 = vld [vmem:[#allocation7 + $0x8] sm:$0xf]
    %v130 = vld [vmem:[#allocation7 + $0xc] sm:$0xf]
    %v131 = vld [vmem:[#allocation7 + $0x10] sm:$0xf]
    %v132 = vld [vmem:[#allocation7 + $0x14] sm:$0xf]
    %v133 = vld [vmem:[#allocation7 + $0x18] sm:$0xf]
    %v134 = vld [vmem:[#allocation7 + $0x1c] sm:$0xf]
    %s135 = scalar_lea.vmem [#allocation7], 32
    %v136 = vld [vmem:[%s135] sm:$0xf]
    %v137 = vld [vmem:[%s135 + $0x4] sm:$0xf]
    %v138 = vld [vmem:[%s135 + $0x8] sm:$0xf]
    %v139 = vld [vmem:[%s135 + $0xc] sm:$0xf]
    %v140 = vld [vmem:[%s135 + $0x10] sm:$0xf]
    %v141 = vld [vmem:[%s135 + $0x14] sm:$0xf]
    %v142 = vld [vmem:[%s135 + $0x18] sm:$0xf]
    %v143 = vld [vmem:[%s135 + $0x1c] sm:$0xf]
    %v152 = vunpack.c.l.b16 %v136
    %v153 = vunpack.c.l.b16 %v137
    %v154 = vunpack.c.l.b16 %v138
    %v155 = vunpack.c.l.b16 %v139
    %v156 = vunpack.c.l.b16 %v140
    %v157 = vunpack.c.l.b16 %v141
    %v158 = vunpack.c.l.b16 %v142
    %v159 = vunpack.c.l.b16 %v143
    %v160 = vpack.c.b16 %v153, %v152
    %v161 = vpack.c.b16 %v155, %v154
    %v162 = vpack.c.b16 %v157, %v156
    %v163 = vpack.c.b16 %v159, %v158
    %vm168 = vcmask 523264
    %v170 = vsel %vm168, %v87, 0
    %172 = vmatprep.subr.bf16.mxu0 0
    %173 = vmatpush1.bf16.msra.mxu0 0
    %174 = vmatprep.subr.bf16.mxu0 0
    %175 = vmatpush1.bf16.msra.mxu0 0
    %176 = vmatprep.subr.bf16.mxu0 0
    %177 = vmatpush1.bf16.msra.mxu0 0
    %178 = vmatprep.subr.bf16.mxu0 0
    %179 = vmatpush1.bf16.msra.mxu0 0
    %180 = vmatprep.subr.bf16.mxu0 0
    %181 = vmatpush1.bf16.msra.mxu0 %v163
    %182 = vmatprep.subr.bf16.mxu0 0
    %183 = vmatpush1.bf16.msra.mxu0 %v162
    %184 = vmatprep.subr.bf16.mxu0 0
    %185 = vmatpush1.bf16.msra.mxu0 %v161
    %186 = vmatprep.subr.bf16.mxu0 0
    %187 = vmatpush1.bf16.msra.mxu0 %v160
    %188 = vmatprep.subr.bf16.mxu0 0
    %189 = vmatpush2.bf16.msra.mxu0 0
    %190 = vmatprep.subr.bf16.mxu0 0
    %191 = vmatpush2.bf16.msra.mxu0 0
    %192 = vmatprep.subr.bf16.mxu0 0
    %193 = vmatpush2.bf16.msra.mxu0 0
    %194 = vmatprep.subr.bf16.mxu0 0
    %195 = vmatpush2.bf16.msra.mxu0 0
    %196 = vmatprep.subr.bf16.mxu0 0
    %197 = vmatpush2.bf16.msra.mxu0 0
    %198 = vmatprep.subr.bf16.mxu0 0
    %199 = vmatpush2.bf16.msra.mxu0 0
    %200 = vmatprep.subr.bf16.mxu0 0
    %201 = vmatpush2.bf16.msra.mxu0 0
    %202 = vmatprep.subr.bf16.mxu0 0
    %203 = vmatpush2.bf16.msra.mxu0 0
    %204 = vmatprep.mubr.bf16.mxu0 0
    %205 = vmatmul.mubr.bf16.gmra.mxu0 %v170
    %v206 = vpop.f32.mrf.mxu0
    %v207 = vadd.f32 0.0, %v206
    %v208 = vpop.f32.mrf.mxu0
    %v209 = vpop.f32.mrf.mxu0
    %v210 = vadd.f32 0.0, %v209
    %v211 = vpop.f32.mrf.mxu0
    %212 = vdwg.mxu0
    %v215 = vunpack.c.l.b16 %v125
    %v216 = vunpack.c.l.b16 %v126
    %v217 = vpack.c.b16 %v216, %v215
    %v226 = vunpack.c.l.b16 %v127
    %v227 = vunpack.c.l.b16 %v128
    %v228 = vunpack.c.l.b16 %v129
    %v229 = vunpack.c.l.b16 %v130
    %v230 = vunpack.c.l.b16 %v131
    %v231 = vunpack.c.l.b16 %v132
    %v232 = vunpack.c.l.b16 %v133
    %v233 = vunpack.c.l.b16 %v134
    %v234 = vpack.c.b16 %v227, %v226
    %v235 = vpack.c.b16 %v229, %v228
    %v236 = vpack.c.b16 %v231, %v230
    %v237 = vpack.c.b16 %v233, %v232
    %v243 = vsel %vm168, %v217, 0
    %245 = vmatprep.subr.bf16.mxu0 0
    %246 = vmatpush1.bf16.msra.mxu0 0
    %247 = vmatprep.subr.bf16.mxu0 0
    %248 = vmatpush1.bf16.msra.mxu0 0
    %249 = vmatprep.subr.bf16.mxu0 0
    %250 = vmatpush1.bf16.msra.mxu0 0
    %251 = vmatprep.subr.bf16.mxu0 0
    %252 = vmatpush1.bf16.msra.mxu0 0
    %253 = vmatprep.subr.bf16.mxu0 0
    %254 = vmatpush1.bf16.msra.mxu0 %v237
    %255 = vmatprep.subr.bf16.mxu0 0
    %256 = vmatpush1.bf16.msra.mxu0 %v236
    %257 = vmatprep.subr.bf16.mxu0 0
    %258 = vmatpush1.bf16.msra.mxu0 %v235
    %259 = vmatprep.subr.bf16.mxu0 0
    %260 = vmatpush1.bf16.msra.mxu0 %v234
    %261 = vmatprep.subr.bf16.mxu0 0
    %262 = vmatpush2.bf16.msra.mxu0 0
    %263 = vmatprep.subr.bf16.mxu0 0
    %264 = vmatpush2.bf16.msra.mxu0 0
    %265 = vmatprep.subr.bf16.mxu0 0
    %266 = vmatpush2.bf16.msra.mxu0 0
    %267 = vmatprep.subr.bf16.mxu0 0
    %268 = vmatpush2.bf16.msra.mxu0 0
    %269 = vmatprep.subr.bf16.mxu0 0
    %270 = vmatpush2.bf16.msra.mxu0 0
    %271 = vmatprep.subr.bf16.mxu0 0
    %272 = vmatpush2.bf16.msra.mxu0 0
    %273 = vmatprep.subr.bf16.mxu0 0
    %274 = vmatpush2.bf16.msra.mxu0 0
    %275 = vmatprep.subr.bf16.mxu0 0
    %276 = vmatpush2.bf16.msra.mxu0 0
    %277 = vmatprep.mubr.bf16.mxu0 0
    %278 = vmatmul.mubr.bf16.gmra.mxu0 %v243
    %v279 = vpop.f32.mrf.mxu0
    %v280 = vadd.f32 %v207, %v279
    %v281 = vpop.f32.mrf.mxu0
    %v282 = vpop.f32.mrf.mxu0
    %v283 = vadd.f32 %v210, %v282
    %v284 = vpop.f32.mrf.mxu0
    %285 = vdwg.mxu0
    %v286 = vld [vmem:[#allocation2] sm:$0xe]
    %v287 = vld [vmem:[#allocation2 + $0x4] sm:$0xf]
    %v288 = vld [vmem:[#allocation2 + $0x8] sm:$0x1]
    %s289 = scalar_lea.vmem [#allocation7], 64
    %v290 = vld [vmem:[%s289] sm:$0xf]
    %v291 = vld [vmem:[%s289 + $0x4] sm:$0xf]
    %v292 = vld [vmem:[%s289 + $0x8] sm:$0xf]
    %v293 = vld [vmem:[%s289 + $0xc] sm:$0xf]
    %v294 = vld [vmem:[%s289 + $0x10] sm:$0xf]
    %v295 = vld [vmem:[%s289 + $0x14] sm:$0xf]
    %v296 = vld [vmem:[%s289 + $0x18] sm:$0xf]
    %v297 = vld [vmem:[%s289 + $0x1c] sm:$0xf]
    %v301 = vunpack.c.l.b16 %v286
    %v302 = vunpack.c.l.b16 %v287
    %v303 = vunpack.c.l.b16 %v288
    %v304 = vpack.c.b16 %v302, %v301
    %v305 = vpack.c.b16 %v303, %v303
    %vm306 = vcmask 1046528
    %v307 = vrot.slane %v304, 1
    %v308 = vrot.slane %v305, 1
    %v309 = vsel %vm306, %v307, %v308
    %v318 = vunpack.c.l.b16 %v290
    %v319 = vunpack.c.l.b16 %v291
    %v320 = vunpack.c.l.b16 %v292
    %v321 = vunpack.c.l.b16 %v293
    %v322 = vunpack.c.l.b16 %v294
    %v323 = vunpack.c.l.b16 %v295
    %v324 = vunpack.c.l.b16 %v296
    %v325 = vunpack.c.l.b16 %v297
    %v326 = vpack.c.b16 %v319, %v318
    %v327 = vpack.c.b16 %v321, %v320
    %v328 = vpack.c.b16 %v323, %v322
    %v329 = vpack.c.b16 %v325, %v324
    %v335 = vsel %vm168, %v309, 0
    %337 = vmatprep.subr.bf16.mxu0 0
    %338 = vmatpush1.bf16.msra.mxu0 0
    %339 = vmatprep.subr.bf16.mxu0 0
    %340 = vmatpush1.bf16.msra.mxu0 0
    %341 = vmatprep.subr.bf16.mxu0 0
    %342 = vmatpush1.bf16.msra.mxu0 0
    %343 = vmatprep.subr.bf16.mxu0 0
    %344 = vmatpush1.bf16.msra.mxu0 0
    %345 = vmatprep.subr.bf16.mxu0 0
    %346 = vmatpush1.bf16.msra.mxu0 %v329
    %347 = vmatprep.subr.bf16.mxu0 0
    %348 = vmatpush1.bf16.msra.mxu0 %v328
    %349 = vmatprep.subr.bf16.mxu0 0
    %350 = vmatpush1.bf16.msra.mxu0 %v327
    %351 = vmatprep.subr.bf16.mxu0 0
    %352 = vmatpush1.bf16.msra.mxu0 %v326
    %353 = vmatprep.subr.bf16.mxu0 0
    %354 = vmatpush2.bf16.msra.mxu0 0
    %355 = vmatprep.subr.bf16.mxu0 0
    %356 = vmatpush2.bf16.msra.mxu0 0
    %357 = vmatprep.subr.bf16.mxu0 0
    %358 = vmatpush2.bf16.msra.mxu0 0
    %359 = vmatprep.subr.bf16.mxu0 0
    %360 = vmatpush2.bf16.msra.mxu0 0
    %361 = vmatprep.subr.bf16.mxu0 0
    %362 = vmatpush2.bf16.msra.mxu0 0
    %363 = vmatprep.subr.bf16.mxu0 0
    %364 = vmatpush2.bf16.msra.mxu0 0
    %365 = vmatprep.subr.bf16.mxu0 0
    %366 = vmatpush2.bf16.msra.mxu0 0
    %367 = vmatprep.subr.bf16.mxu0 0
    %368 = vmatpush2.bf16.msra.mxu0 0
    %369 = vmatprep.mubr.bf16.mxu0 0
    %370 = vmatmul.mubr.bf16.gmra.mxu0 %v335
    %v371 = vpop.f32.mrf.mxu0
    %v372 = vadd.f32 0.0, %v371
    %v373 = vpop.f32.mrf.mxu0
    %v374 = vpop.f32.mrf.mxu0
    %v375 = vadd.f32 0.0, %v374
    %v376 = vpop.f32.mrf.mxu0
    %377 = vdwg.mxu0
    %v378 = vadd.f32 %v280, %v372
    %v379 = vadd.f32 %v283, %v375
    %v381 = vlaneseq
    %v382 = vshrl.u32 %v381, 7
    %v383 = vsub.s32 0, %v382
    %v384 = vrot.slane %v83, %v383
    %v386 = vadd.f32 %v378, %v384
    %v387 = vadd.f32 %v379, %v384
    %v388 = vmax.f32 %v386, 0.0
    %v389 = vmax.f32 %v387, 0.0
    %v390 = vpack.c.bf16 %v389, %v388
    %v392 = vunpack.c.l.b16 %v390
    %v393 = vunpack.c.h.b16 %v390
    %v394 = vpack.c.b16 %v392, %v392
    %v395 = vpack.c.b16 %v393, %v393
    %v397 = vshrl.u32 %v394, 16
    %v399 = vrot.slane %v397, 7
    %v400 = vshll.u32 %v394, 16
    %v402 = vor.u32 %v399, %v400
    %v403 = vrot.slane %v399, 4
    %v405 = vshrl.u32 %v395, 16
    %v407 = vrot.slane %v405, 7
    %v408 = vshll.u32 %v395, 16
    %v410 = vor.u32 %v407, %v408
    %v411 = vsel %vm94, %v403, %v410
    %v412 = vrot.slane %v407, 4
    %vm416 = vcmask 1043456
    %vm417 = vmand %vm416, %vm69
    %v418 = vld [vmem:[#allocation3] sm:$0xf]
    %v419 = vsel %vm417, %v402, %v418
    %420 = vst [vmem:[#allocation3] sm:$0xf] %v419
    %421 = vst [vmem:[#allocation3 + $0x4] sm:$0xf] %v411
    %v422 = vld [vmem:[#allocation3 + $0x8] sm:$0x1]
    %v423 = vsel %vm75, %v412, %v422
    %424 = vst [vmem:[#allocation3 + $0x8] sm:$0x1] %v423
    %v425 = vld [vmem:[#allocation3] sm:$0xf]
    %v426 = vld [vmem:[#allocation3 + $0x4] sm:$0xf]
    %v427 = vld [vmem:[#allocation9] sm:$0xf]
    %v428 = vld [vmem:[#allocation9 + $0x4] sm:$0xf]
    %v429 = vld [vmem:[#allocation9 + $0x8] sm:$0xf]
    %v430 = vld [vmem:[#allocation9 + $0xc] sm:$0xf]
    %v431 = vld [vmem:[#allocation9 + $0x10] sm:$0xf]
    %v432 = vld [vmem:[#allocation9 + $0x14] sm:$0xf]
    %v433 = vld [vmem:[#allocation9 + $0x18] sm:$0xf]
    %v434 = vld [vmem:[#allocation9 + $0x1c] sm:$0xf]
    %v435 = vld [vmem:[#allocation9 + $0x20] sm:$0xf]
    %v436 = vld [vmem:[#allocation9 + $0x24] sm:$0xf]
    %v437 = vld [vmem:[#allocation9 + $0x28] sm:$0xf]
    %v438 = vld [vmem:[#allocation9 + $0x2c] sm:$0xf]
    %v439 = vld [vmem:[#allocation9 + $0x30] sm:$0xf]
    %v440 = vld [vmem:[#allocation9 + $0x34] sm:$0xf]
    %v441 = vld [vmem:[#allocation9 + $0x38] sm:$0xf]
    %v442 = vld [vmem:[#allocation9 + $0x3c] sm:$0xf]
    %s443 = scalar_lea.vmem [#allocation9], 64
    %v444 = vld [vmem:[%s443] sm:$0xf]
    %v445 = vld [vmem:[%s443 + $0x4] sm:$0xf]
    %v446 = vld [vmem:[%s443 + $0x8] sm:$0xf]
    %v447 = vld [vmem:[%s443 + $0xc] sm:$0xf]
    %v448 = vld [vmem:[%s443 + $0x10] sm:$0xf]
    %v449 = vld [vmem:[%s443 + $0x14] sm:$0xf]
    %v450 = vld [vmem:[%s443 + $0x18] sm:$0xf]
    %v451 = vld [vmem:[%s443 + $0x1c] sm:$0xf]
    %v452 = vld [vmem:[%s443 + $0x20] sm:$0xf]
    %v453 = vld [vmem:[%s443 + $0x24] sm:$0xf]
    %v454 = vld [vmem:[%s443 + $0x28] sm:$0xf]
    %v455 = vld [vmem:[%s443 + $0x2c] sm:$0xf]
    %v456 = vld [vmem:[%s443 + $0x30] sm:$0xf]
    %v457 = vld [vmem:[%s443 + $0x34] sm:$0xf]
    %v458 = vld [vmem:[%s443 + $0x38] sm:$0xf]
    %v459 = vld [vmem:[%s443 + $0x3c] sm:$0xf]
    %v476 = vunpack.c.l.b16 %v444
    %v477 = vunpack.c.l.b16 %v445
    %v478 = vunpack.c.l.b16 %v446
    %v479 = vunpack.c.l.b16 %v447
    %v480 = vunpack.c.l.b16 %v448
    %v481 = vunpack.c.l.b16 %v449
    %v482 = vunpack.c.l.b16 %v450
    %v483 = vunpack.c.l.b16 %v451
    %v484 = vunpack.c.l.b16 %v452
    %v485 = vunpack.c.l.b16 %v453
    %v486 = vunpack.c.l.b16 %v454
    %v487 = vunpack.c.l.b16 %v455
    %v488 = vunpack.c.l.b16 %v456
    %v489 = vunpack.c.l.b16 %v457
    %v490 = vunpack.c.l.b16 %v458
    %v491 = vunpack.c.l.b16 %v459
    %v492 = vpack.c.b16 %v477, %v476
    %v493 = vpack.c.b16 %v479, %v478
    %v494 = vpack.c.b16 %v481, %v480
    %v495 = vpack.c.b16 %v483, %v482
    %v496 = vpack.c.b16 %v485, %v484
    %v497 = vpack.c.b16 %v487, %v486
    %v498 = vpack.c.b16 %v489, %v488
    %v499 = vpack.c.b16 %v491, %v490
    %508 = vmatprep.subr.bf16.mxu0 0
    %509 = vmatpush1.bf16.msra.mxu0 %v499
    %510 = vmatprep.subr.bf16.mxu0 0
    %511 = vmatpush1.bf16.msra.mxu0 %v498
    %512 = vmatprep.subr.bf16.mxu0 0
    %513 = vmatpush1.bf16.msra.mxu0 %v497
    %514 = vmatprep.subr.bf16.mxu0 0
    %515 = vmatpush1.bf16.msra.mxu0 %v496
    %516 = vmatprep.subr.bf16.mxu0 0
    %517 = vmatpush1.bf16.msra.mxu0 %v495
    %518 = vmatprep.subr.bf16.mxu0 0
    %519 = vmatpush1.bf16.msra.mxu0 %v494
    %520 = vmatprep.subr.bf16.mxu0 0
    %521 = vmatpush1.bf16.msra.mxu0 %v493
    %522 = vmatprep.subr.bf16.mxu0 0
    %523 = vmatpush1.bf16.msra.mxu0 %v492
    %524 = vmatprep.subr.bf16.mxu0 0
    %525 = vmatpush2.bf16.msra.mxu0 0
    %526 = vmatprep.subr.bf16.mxu0 0
    %527 = vmatpush2.bf16.msra.mxu0 0
    %528 = vmatprep.subr.bf16.mxu0 0
    %529 = vmatpush2.bf16.msra.mxu0 0
    %530 = vmatprep.subr.bf16.mxu0 0
    %531 = vmatpush2.bf16.msra.mxu0 0
    %532 = vmatprep.subr.bf16.mxu0 0
    %533 = vmatpush2.bf16.msra.mxu0 0
    %534 = vmatprep.subr.bf16.mxu0 0
    %535 = vmatpush2.bf16.msra.mxu0 0
    %536 = vmatprep.subr.bf16.mxu0 0
    %537 = vmatpush2.bf16.msra.mxu0 0
    %538 = vmatprep.subr.bf16.mxu0 0
    %539 = vmatpush2.bf16.msra.mxu0 0
    %540 = vmatprep.mubr.bf16.mxu0 0
    %541 = vmatmul.mubr.bf16.gmra.mxu0 %v390
    %v542 = vpop.f32.mrf.mxu0
    %v543 = vadd.f32 0.0, %v542
    %v544 = vpop.f32.mrf.mxu0
    %v545 = vpop.f32.mrf.mxu0
    %v546 = vadd.f32 0.0, %v545
    %v547 = vpop.f32.mrf.mxu0
    %548 = vdwg.mxu0
    %v551 = vunpack.c.l.b16 %v425
    %v552 = vunpack.c.l.b16 %v426
    %v553 = vpack.c.b16 %v552, %v551
    %v571 = vunpack.c.l.b16 %v427
    %v572 = vunpack.c.l.b16 %v428
    %v573 = vunpack.c.l.b16 %v429
    %v574 = vunpack.c.l.b16 %v430
    %v575 = vunpack.c.l.b16 %v431
    %v576 = vunpack.c.l.b16 %v432
    %v577 = vunpack.c.l.b16 %v433
    %v578 = vunpack.c.l.b16 %v434
    %v579 = vunpack.c.l.b16 %v435
    %v580 = vunpack.c.l.b16 %v436
    %v581 = vunpack.c.l.b16 %v437
    %v582 = vunpack.c.l.b16 %v438
    %v583 = vunpack.c.l.b16 %v439
    %v584 = vunpack.c.l.b16 %v440
    %v585 = vunpack.c.l.b16 %v441
    %v586 = vunpack.c.l.b16 %v442
    %v587 = vpack.c.b16 %v572, %v571
    %v588 = vpack.c.b16 %v574, %v573
    %v589 = vpack.c.b16 %v576, %v575
    %v590 = vpack.c.b16 %v578, %v577
    %v591 = vpack.c.b16 %v580, %v579
    %v592 = vpack.c.b16 %v582, %v581
    %v593 = vpack.c.b16 %v584, %v583
    %v594 = vpack.c.b16 %v586, %v585
    %603 = vmatprep.subr.bf16.mxu0 0
    %604 = vmatpush1.bf16.msra.mxu0 %v594
    %605 = vmatprep.subr.bf16.mxu0 0
    %606 = vmatpush1.bf16.msra.mxu0 %v593
    %607 = vmatprep.subr.bf16.mxu0 0
    %608 = vmatpush1.bf16.msra.mxu0 %v592
    %609 = vmatprep.subr.bf16.mxu0 0
    %610 = vmatpush1.bf16.msra.mxu0 %v591
    %611 = vmatprep.subr.bf16.mxu0 0
    %612 = vmatpush1.bf16.msra.mxu0 %v590
    %613 = vmatprep.subr.bf16.mxu0 0
    %614 = vmatpush1.bf16.msra.mxu0 %v589
    %615 = vmatprep.subr.bf16.mxu0 0
    %616 = vmatpush1.bf16.msra.mxu0 %v588
    %617 = vmatprep.subr.bf16.mxu0 0
    %618 = vmatpush1.bf16.msra.mxu0 %v587
    %619 = vmatprep.subr.bf16.mxu0 0
    %620 = vmatpush2.bf16.msra.mxu0 0
    %621 = vmatprep.subr.bf16.mxu0 0
    %622 = vmatpush2.bf16.msra.mxu0 0
    %623 = vmatprep.subr.bf16.mxu0 0
    %624 = vmatpush2.bf16.msra.mxu0 0
    %625 = vmatprep.subr.bf16.mxu0 0
    %626 = vmatpush2.bf16.msra.mxu0 0
    %627 = vmatprep.subr.bf16.mxu0 0
    %628 = vmatpush2.bf16.msra.mxu0 0
    %629 = vmatprep.subr.bf16.mxu0 0
    %630 = vmatpush2.bf16.msra.mxu0 0
    %631 = vmatprep.subr.bf16.mxu0 0
    %632 = vmatpush2.bf16.msra.mxu0 0
    %633 = vmatprep.subr.bf16.mxu0 0
    %634 = vmatpush2.bf16.msra.mxu0 0
    %635 = vmatprep.mubr.bf16.mxu0 0
    %636 = vmatmul.mubr.bf16.gmra.mxu0 %v553
    %v637 = vpop.f32.mrf.mxu0
    %v638 = vadd.f32 %v543, %v637
    %v639 = vpop.f32.mrf.mxu0
    %v640 = vpop.f32.mrf.mxu0
    %v641 = vadd.f32 %v546, %v640
    %v642 = vpop.f32.mrf.mxu0
    %643 = vdwg.mxu0
    %v644 = vld [vmem:[#allocation3] sm:$0xe]
    %v645 = vld [vmem:[#allocation3 + $0x4] sm:$0xf]
    %v646 = vld [vmem:[#allocation3 + $0x8] sm:$0x1]
    %s647 = scalar_lea.vmem [#allocation9], 128
    %v648 = vld [vmem:[%s647] sm:$0xf]
    %v649 = vld [vmem:[%s647 + $0x4] sm:$0xf]
    %v650 = vld [vmem:[%s647 + $0x8] sm:$0xf]
    %v651 = vld [vmem:[%s647 + $0xc] sm:$0xf]
    %v652 = vld [vmem:[%s647 + $0x10] sm:$0xf]
    %v653 = vld [vmem:[%s647 + $0x14] sm:$0xf]
    %v654 = vld [vmem:[%s647 + $0x18] sm:$0xf]
    %v655 = vld [vmem:[%s647 + $0x1c] sm:$0xf]
    %v656 = vld [vmem:[%s647 + $0x20] sm:$0xf]
    %v657 = vld [vmem:[%s647 + $0x24] sm:$0xf]
    %v658 = vld [vmem:[%s647 + $0x28] sm:$0xf]
    %v659 = vld [vmem:[%s647 + $0x2c] sm:$0xf]
    %v660 = vld [vmem:[%s647 + $0x30] sm:$0xf]
    %v661 = vld [vmem:[%s647 + $0x34] sm:$0xf]
    %v662 = vld [vmem:[%s647 + $0x38] sm:$0xf]
    %v663 = vld [vmem:[%s647 + $0x3c] sm:$0xf]
    %v667 = vunpack.c.l.b16 %v644
    %v668 = vunpack.c.l.b16 %v645
    %v669 = vunpack.c.l.b16 %v646
    %v670 = vpack.c.b16 %v668, %v667
    %v671 = vpack.c.b16 %v669, %v669
    %v672 = vrot.slane %v670, 1
    %v673 = vrot.slane %v671, 1
    %v674 = vsel %vm306, %v672, %v673
    %v692 = vunpack.c.l.b16 %v648
    %v693 = vunpack.c.l.b16 %v649
    %v694 = vunpack.c.l.b16 %v650
    %v695 = vunpack.c.l.b16 %v651
    %v696 = vunpack.c.l.b16 %v652
    %v697 = vunpack.c.l.b16 %v653
    %v698 = vunpack.c.l.b16 %v654
    %v699 = vunpack.c.l.b16 %v655
    %v700 = vunpack.c.l.b16 %v656
    %v701 = vunpack.c.l.b16 %v657
    %v702 = vunpack.c.l.b16 %v658
    %v703 = vunpack.c.l.b16 %v659
    %v704 = vunpack.c.l.b16 %v660
    %v705 = vunpack.c.l.b16 %v661
    %v706 = vunpack.c.l.b16 %v662
    %v707 = vunpack.c.l.b16 %v663
    %v708 = vpack.c.b16 %v693, %v692
    %v709 = vpack.c.b16 %v695, %v694
    %v710 = vpack.c.b16 %v697, %v696
    %v711 = vpack.c.b16 %v699, %v698
    %v712 = vpack.c.b16 %v701, %v700
    %v713 = vpack.c.b16 %v703, %v702
    %v714 = vpack.c.b16 %v705, %v704
    %v715 = vpack.c.b16 %v707, %v706
    %724 = vmatprep.subr.bf16.mxu0 0
    %725 = vmatpush1.bf16.msra.mxu0 %v715
    %726 = vmatprep.subr.bf16.mxu0 0
    %727 = vmatpush1.bf16.msra.mxu0 %v714
    %728 = vmatprep.subr.bf16.mxu0 0
    %729 = vmatpush1.bf16.msra.mxu0 %v713
    %730 = vmatprep.subr.bf16.mxu0 0
    %731 = vmatpush1.bf16.msra.mxu0 %v712
    %732 = vmatprep.subr.bf16.mxu0 0
    %733 = vmatpush1.bf16.msra.mxu0 %v711
    %734 = vmatprep.subr.bf16.mxu0 0
    %735 = vmatpush1.bf16.msra.mxu0 %v710
    %736 = vmatprep.subr.bf16.mxu0 0
    %737 = vmatpush1.bf16.msra.mxu0 %v709
    %738 = vmatprep.subr.bf16.mxu0 0
    %739 = vmatpush1.bf16.msra.mxu0 %v708
    %740 = vmatprep.subr.bf16.mxu0 0
    %741 = vmatpush2.bf16.msra.mxu0 0
    %742 = vmatprep.subr.bf16.mxu0 0
    %743 = vmatpush2.bf16.msra.mxu0 0
    %744 = vmatprep.subr.bf16.mxu0 0
    %745 = vmatpush2.bf16.msra.mxu0 0
    %746 = vmatprep.subr.bf16.mxu0 0
    %747 = vmatpush2.bf16.msra.mxu0 0
    %748 = vmatprep.subr.bf16.mxu0 0
    %749 = vmatpush2.bf16.msra.mxu0 0
    %750 = vmatprep.subr.bf16.mxu0 0
    %751 = vmatpush2.bf16.msra.mxu0 0
    %752 = vmatprep.subr.bf16.mxu0 0
    %753 = vmatpush2.bf16.msra.mxu0 0
    %754 = vmatprep.subr.bf16.mxu0 0
    %755 = vmatpush2.bf16.msra.mxu0 0
    %756 = vmatprep.mubr.bf16.mxu0 0
    %757 = vmatmul.mubr.bf16.gmra.mxu0 %v674
    %v758 = vpop.f32.mrf.mxu0
    %v759 = vadd.f32 0.0, %v758
    %v760 = vpop.f32.mrf.mxu0
    %v761 = vpop.f32.mrf.mxu0
    %v762 = vadd.f32 0.0, %v761
    %v763 = vpop.f32.mrf.mxu0
    %764 = vdwg.mxu0
    %v765 = vadd.f32 %v638, %v759
    %v766 = vadd.f32 %v641, %v762
    %v768 = vlaneseq
    %v769 = vshrl.u32 %v768, 7
    %v770 = vsub.s32 0, %v769
    %v771 = vrot.slane %v84, %v770
    %v773 = vadd.f32 %v765, %v771
    %v774 = vadd.f32 %v766, %v771
    %v775 = vmax.f32 %v773, 0.0
    %v776 = vmax.f32 %v774, 0.0
    %777 = vst [vmem:[#allocation10] sm:$0xff] %v775
    %778 = vst [vmem:[#allocation10 + $0x8] sm:$0xff] %v776
    %s779 = scalar_lea.vmem [#allocation4], 16
    %v780 = vld [vmem:[%s779] sm:$0xff]
    %v781 = vld [vmem:[%s779 + $0x8] sm:$0xff]
    %v782 = vpack.c.bf16 %v781, %v780
    %v784 = vunpack.c.l.b16 %v782
    %v785 = vunpack.c.h.b16 %v782
    %v786 = vpack.c.b16 %v784, %v784
    %v787 = vpack.c.b16 %v785, %v785
    %v789 = vshrl.u32 %v786, 16
    %v791 = vrot.slane %v789, 7
    %v792 = vshll.u32 %v786, 16
    %v794 = vor.u32 %v791, %v792
    %v795 = vrot.slane %v791, 4
    %v797 = vshrl.u32 %v787, 16
    %v799 = vrot.slane %v797, 7
    %v800 = vshll.u32 %v787, 16
    %v802 = vor.u32 %v799, %v800
    %v803 = vsel %vm94, %v795, %v802
    %v804 = vrot.slane %v799, 4
    %v808 = vld [vmem:[#allocation2] sm:$0xf]
    %v809 = vsel %vm116, %v794, %v808
    %810 = vst [vmem:[#allocation2] sm:$0xf] %v809
    %811 = vst.msk [vmem:[#allocation2 + $0x4] sm:$0xf] %vm120, %v803
    %v812 = vld [vmem:[#allocation2 + $0x8] sm:$0x1]
    %v813 = vsel %vm65, %v804, %v812
    %814 = vst [vmem:[#allocation2 + $0x8] sm:$0x1] %v813
    %v815 = vld [vmem:[#allocation2] sm:$0xf]
    %v816 = vld [vmem:[#allocation2 + $0x4] sm:$0xf]
    %v817 = vld [vmem:[#allocation7] sm:$0xf]
    %v818 = vld [vmem:[#allocation7 + $0x4] sm:$0xf]
    %v819 = vld [vmem:[#allocation7 + $0x8] sm:$0xf]
    %v820 = vld [vmem:[#allocation7 + $0xc] sm:$0xf]
    %v821 = vld [vmem:[#allocation7 + $0x10] sm:$0xf]
    %v822 = vld [vmem:[#allocation7 + $0x14] sm:$0xf]
    %v823 = vld [vmem:[#allocation7 + $0x18] sm:$0xf]
    %v824 = vld [vmem:[#allocation7 + $0x1c] sm:$0xf]
    %v825 = vld [vmem:[%s135] sm:$0xf]
    %v826 = vld [vmem:[%s135 + $0x4] sm:$0xf]
    %v827 = vld [vmem:[%s135 + $0x8] sm:$0xf]
    %v828 = vld [vmem:[%s135 + $0xc] sm:$0xf]
    %v829 = vld [vmem:[%s135 + $0x10] sm:$0xf]
    %v830 = vld [vmem:[%s135 + $0x14] sm:$0xf]
    %v831 = vld [vmem:[%s135 + $0x18] sm:$0xf]
    %v832 = vld [vmem:[%s135 + $0x1c] sm:$0xf]
    %v841 = vunpack.c.l.b16 %v825
    %v842 = vunpack.c.l.b16 %v826
    %v843 = vunpack.c.l.b16 %v827
    %v844 = vunpack.c.l.b16 %v828
    %v845 = vunpack.c.l.b16 %v829
    %v846 = vunpack.c.l.b16 %v830
    %v847 = vunpack.c.l.b16 %v831
    %v848 = vunpack.c.l.b16 %v832
    %v849 = vpack.c.b16 %v842, %v841
    %v850 = vpack.c.b16 %v844, %v843
    %v851 = vpack.c.b16 %v846, %v845
    %v852 = vpack.c.b16 %v848, %v847
    %v858 = vsel %vm168, %v782, 0
    %860 = vmatprep.subr.bf16.mxu0 0
    %861 = vmatpush1.bf16.msra.mxu0 0
    %862 = vmatprep.subr.bf16.mxu0 0
    %863 = vmatpush1.bf16.msra.mxu0 0
    %864 = vmatprep.subr.bf16.mxu0 0
    %865 = vmatpush1.bf16.msra.mxu0 0
    %866 = vmatprep.subr.bf16.mxu0 0
    %867 = vmatpush1.bf16.msra.mxu0 0
    %868 = vmatprep.subr.bf16.mxu0 0
    %869 = vmatpush1.bf16.msra.mxu0 %v852
    %870 = vmatprep.subr.bf16.mxu0 0
    %871 = vmatpush1.bf16.msra.mxu0 %v851
    %872 = vmatprep.subr.bf16.mxu0 0
    %873 = vmatpush1.bf16.msra.mxu0 %v850
    %874 = vmatprep.subr.bf16.mxu0 0
    %875 = vmatpush1.bf16.msra.mxu0 %v849
    %876 = vmatprep.subr.bf16.mxu0 0
    %877 = vmatpush2.bf16.msra.mxu0 0
    %878 = vmatprep.subr.bf16.mxu0 0
    %879 = vmatpush2.bf16.msra.mxu0 0
    %880 = vmatprep.subr.bf16.mxu0 0
    %881 = vmatpush2.bf16.msra.mxu0 0
    %882 = vmatprep.subr.bf16.mxu0 0
    %883 = vmatpush2.bf16.msra.mxu0 0
    %884 = vmatprep.subr.bf16.mxu0 0
    %885 = vmatpush2.bf16.msra.mxu0 0
    %886 = vmatprep.subr.bf16.mxu0 0
    %887 = vmatpush2.bf16.msra.mxu0 0
    %888 = vmatprep.subr.bf16.mxu0 0
    %889 = vmatpush2.bf16.msra.mxu0 0
    %890 = vmatprep.subr.bf16.mxu0 0
    %891 = vmatpush2.bf16.msra.mxu0 0
    %892 = vmatprep.mubr.bf16.mxu0 0
    %893 = vmatmul.mubr.bf16.gmra.mxu0 %v858
    %v894 = vpop.f32.mrf.mxu0
    %v895 = vadd.f32 0.0, %v894
    %v896 = vpop.f32.mrf.mxu0
    %v897 = vpop.f32.mrf.mxu0
    %v898 = vadd.f32 0.0, %v897
    %v899 = vpop.f32.mrf.mxu0
    %900 = vdwg.mxu0
    %v903 = vunpack.c.l.b16 %v815
    %v904 = vunpack.c.l.b16 %v816
    %v905 = vpack.c.b16 %v904, %v903
    %v914 = vunpack.c.l.b16 %v817
    %v915 = vunpack.c.l.b16 %v818
    %v916 = vunpack.c.l.b16 %v819
    %v917 = vunpack.c.l.b16 %v820
    %v918 = vunpack.c.l.b16 %v821
    %v919 = vunpack.c.l.b16 %v822
    %v920 = vunpack.c.l.b16 %v823
    %v921 = vunpack.c.l.b16 %v824
    %v922 = vpack.c.b16 %v915, %v914
    %v923 = vpack.c.b16 %v917, %v916
    %v924 = vpack.c.b16 %v919, %v918
    %v925 = vpack.c.b16 %v921, %v920
    %v931 = vsel %vm168, %v905, 0
    %933 = vmatprep.subr.bf16.mxu0 0
    %934 = vmatpush1.bf16.msra.mxu0 0
    %935 = vmatprep.subr.bf16.mxu0 0
    %936 = vmatpush1.bf16.msra.mxu0 0
    %937 = vmatprep.subr.bf16.mxu0 0
    %938 = vmatpush1.bf16.msra.mxu0 0
    %939 = vmatprep.subr.bf16.mxu0 0
    %940 = vmatpush1.bf16.msra.mxu0 0
    %941 = vmatprep.subr.bf16.mxu0 0
    %942 = vmatpush1.bf16.msra.mxu0 %v925
    %943 = vmatprep.subr.bf16.mxu0 0
    %944 = vmatpush1.bf16.msra.mxu0 %v924
    %945 = vmatprep.subr.bf16.mxu0 0
    %946 = vmatpush1.bf16.msra.mxu0 %v923
    %947 = vmatprep.subr.bf16.mxu0 0
    %948 = vmatpush1.bf16.msra.mxu0 %v922
    %949 = vmatprep.subr.bf16.mxu0 0
    %950 = vmatpush2.bf16.msra.mxu0 0
    %951 = vmatprep.subr.bf16.mxu0 0
    %952 = vmatpush2.bf16.msra.mxu0 0
    %953 = vmatprep.subr.bf16.mxu0 0
    %954 = vmatpush2.bf16.msra.mxu0 0
    %955 = vmatprep.subr.bf16.mxu0 0
    %956 = vmatpush2.bf16.msra.mxu0 0
    %957 = vmatprep.subr.bf16.mxu0 0
    %958 = vmatpush2.bf16.msra.mxu0 0
    %959 = vmatprep.subr.bf16.mxu0 0
    %960 = vmatpush2.bf16.msra.mxu0 0
    %961 = vmatprep.subr.bf16.mxu0 0
    %962 = vmatpush2.bf16.msra.mxu0 0
    %963 = vmatprep.subr.bf16.mxu0 0
    %964 = vmatpush2.bf16.msra.mxu0 0
    %965 = vmatprep.mubr.bf16.mxu0 0
    %966 = vmatmul.mubr.bf16.gmra.mxu0 %v931
    %v967 = vpop.f32.mrf.mxu0
    %v968 = vadd.f32 %v895, %v967
    %v969 = vpop.f32.mrf.mxu0
    %v970 = vpop.f32.mrf.mxu0
    %v971 = vadd.f32 %v898, %v970
    %v972 = vpop.f32.mrf.mxu0
    %973 = vdwg.mxu0
    %v974 = vld [vmem:[#allocation2] sm:$0xe]
    %v975 = vld [vmem:[#allocation2 + $0x4] sm:$0xf]
    %v976 = vld [vmem:[#allocation2 + $0x8] sm:$0x1]
    %v977 = vld [vmem:[%s289] sm:$0xf]
    %v978 = vld [vmem:[%s289 + $0x4] sm:$0xf]
    %v979 = vld [vmem:[%s289 + $0x8] sm:$0xf]
    %v980 = vld [vmem:[%s289 + $0xc] sm:$0xf]
    %v981 = vld [vmem:[%s289 + $0x10] sm:$0xf]
    %v982 = vld [vmem:[%s289 + $0x14] sm:$0xf]
    %v983 = vld [vmem:[%s289 + $0x18] sm:$0xf]
    %v984 = vld [vmem:[%s289 + $0x1c] sm:$0xf]
    %v988 = vunpack.c.l.b16 %v974
    %v989 = vunpack.c.l.b16 %v975
    %v990 = vunpack.c.l.b16 %v976
    %v991 = vpack.c.b16 %v989, %v988
    %v992 = vpack.c.b16 %v990, %v990
    %v993 = vrot.slane %v991, 1
    %v994 = vrot.slane %v992, 1
    %v995 = vsel %vm306, %v993, %v994
    %v1004 = vunpack.c.l.b16 %v977
    %v1005 = vunpack.c.l.b16 %v978
    %v1006 = vunpack.c.l.b16 %v979
    %v1007 = vunpack.c.l.b16 %v980
    %v1008 = vunpack.c.l.b16 %v981
    %v1009 = vunpack.c.l.b16 %v982
    %v1010 = vunpack.c.l.b16 %v983
    %v1011 = vunpack.c.l.b16 %v984
    %v1012 = vpack.c.b16 %v1005, %v1004
    %v1013 = vpack.c.b16 %v1007, %v1006
    %v1014 = vpack.c.b16 %v1009, %v1008
    %v1015 = vpack.c.b16 %v1011, %v1010
    %v1021 = vsel %vm168, %v995, 0
    %1023 = vmatprep.subr.bf16.mxu0 0
    %1024 = vmatpush1.bf16.msra.mxu0 0
    %1025 = vmatprep.subr.bf16.mxu0 0
    %1026 = vmatpush1.bf16.msra.mxu0 0
    %1027 = vmatprep.subr.bf16.mxu0 0
    %1028 = vmatpush1.bf16.msra.mxu0 0
    %1029 = vmatprep.subr.bf16.mxu0 0
    %1030 = vmatpush1.bf16.msra.mxu0 0
    %1031 = vmatprep.subr.bf16.mxu0 0
    %1032 = vmatpush1.bf16.msra.mxu0 %v1015
    %1033 = vmatprep.subr.bf16.mxu0 0
    %1034 = vmatpush1.bf16.msra.mxu0 %v1014
    %1035 = vmatprep.subr.bf16.mxu0 0
    %1036 = vmatpush1.bf16.msra.mxu0 %v1013
    %1037 = vmatprep.subr.bf16.mxu0 0
    %1038 = vmatpush1.bf16.msra.mxu0 %v1012
    %1039 = vmatprep.subr.bf16.mxu0 0
    %1040 = vmatpush2.bf16.msra.mxu0 0
    %1041 = vmatprep.subr.bf16.mxu0 0
    %1042 = vmatpush2.bf16.msra.mxu0 0
    %1043 = vmatprep.subr.bf16.mxu0 0
    %1044 = vmatpush2.bf16.msra.mxu0 0
    %1045 = vmatprep.subr.bf16.mxu0 0
    %1046 = vmatpush2.bf16.msra.mxu0 0
    %1047 = vmatprep.subr.bf16.mxu0 0
    %1048 = vmatpush2.bf16.msra.mxu0 0
    %1049 = vmatprep.subr.bf16.mxu0 0
    %1050 = vmatpush2.bf16.msra.mxu0 0
    %1051 = vmatprep.subr.bf16.mxu0 0
    %1052 = vmatpush2.bf16.msra.mxu0 0
    %1053 = vmatprep.subr.bf16.mxu0 0
    %1054 = vmatpush2.bf16.msra.mxu0 0
    %1055 = vmatprep.mubr.bf16.mxu0 0
    %1056 = vmatmul.mubr.bf16.gmra.mxu0 %v1021
    %v1057 = vpop.f32.mrf.mxu0
    %v1058 = vadd.f32 0.0, %v1057
    %v1059 = vpop.f32.mrf.mxu0
    %v1060 = vpop.f32.mrf.mxu0
    %v1061 = vadd.f32 0.0, %v1060
    %v1062 = vpop.f32.mrf.mxu0
    %1063 = vdwg.mxu0
    %v1064 = vadd.f32 %v968, %v1058
    %v1065 = vadd.f32 %v971, %v1061
    %v1066 = vadd.f32 %v1064, %v384
    %v1067 = vadd.f32 %v1065, %v384
    %v1068 = vmax.f32 %v1066, 0.0
    %v1069 = vmax.f32 %v1067, 0.0
    %v1070 = vpack.c.bf16 %v1069, %v1068
    %v1072 = vunpack.c.l.b16 %v1070
    %v1073 = vunpack.c.h.b16 %v1070
    %v1074 = vpack.c.b16 %v1072, %v1072
    %v1075 = vpack.c.b16 %v1073, %v1073
    %v1077 = vshrl.u32 %v1074, 16
    %v1079 = vrot.slane %v1077, 7
    %v1080 = vshll.u32 %v1074, 16
    %v1082 = vor.u32 %v1079, %v1080
    %v1083 = vrot.slane %v1079, 4
    %v1085 = vshrl.u32 %v1075, 16
    %v1087 = vrot.slane %v1085, 7
    %v1088 = vshll.u32 %v1075, 16
    %v1090 = vor.u32 %v1087, %v1088
    %v1091 = vsel %vm94, %v1083, %v1090
    %v1092 = vrot.slane %v1087, 4
    %v1096 = vld [vmem:[#allocation3] sm:$0xf]
    %v1097 = vsel %vm417, %v1082, %v1096
    %1098 = vst [vmem:[#allocation3] sm:$0xf] %v1097
    %1099 = vst [vmem:[#allocation3 + $0x4] sm:$0xf] %v1091
    %v1100 = vld [vmem:[#allocation3 + $0x8] sm:$0x1]
    %v1101 = vsel %vm75, %v1092, %v1100
    %1102 = vst [vmem:[#allocation3 + $0x8] sm:$0x1] %v1101
    %v1103 = vld [vmem:[#allocation3] sm:$0xf]
    %v1104 = vld [vmem:[#allocation3 + $0x4] sm:$0xf]
    %v1105 = vld [vmem:[#allocation9] sm:$0xf]
    %v1106 = vld [vmem:[#allocation9 + $0x4] sm:$0xf]
    %v1107 = vld [vmem:[#allocation9 + $0x8] sm:$0xf]
    %v1108 = vld [vmem:[#allocation9 + $0xc] sm:$0xf]
    %v1109 = vld [vmem:[#allocation9 + $0x10] sm:$0xf]
    %v1110 = vld [vmem:[#allocation9 + $0x14] sm:$0xf]
    %v1111 = vld [vmem:[#allocation9 + $0x18] sm:$0xf]
    %v1112 = vld [vmem:[#allocation9 + $0x1c] sm:$0xf]
    %v1113 = vld [vmem:[#allocation9 + $0x20] sm:$0xf]
    %v1114 = vld [vmem:[#allocation9 + $0x24] sm:$0xf]
    %v1115 = vld [vmem:[#allocation9 + $0x28] sm:$0xf]
    %v1116 = vld [vmem:[#allocation9 + $0x2c] sm:$0xf]
    %v1117 = vld [vmem:[#allocation9 + $0x30] sm:$0xf]
    %v1118 = vld [vmem:[#allocation9 + $0x34] sm:$0xf]
    %v1119 = vld [vmem:[#allocation9 + $0x38] sm:$0xf]
    %v1120 = vld [vmem:[#allocation9 + $0x3c] sm:$0xf]
    %v1121 = vld [vmem:[%s443] sm:$0xf]
    %v1122 = vld [vmem:[%s443 + $0x4] sm:$0xf]
    %v1123 = vld [vmem:[%s443 + $0x8] sm:$0xf]
    %v1124 = vld [vmem:[%s443 + $0xc] sm:$0xf]
    %v1125 = vld [vmem:[%s443 + $0x10] sm:$0xf]
    %v1126 = vld [vmem:[%s443 + $0x14] sm:$0xf]
    %v1127 = vld [vmem:[%s443 + $0x18] sm:$0xf]
    %v1128 = vld [vmem:[%s443 + $0x1c] sm:$0xf]
    %v1129 = vld [vmem:[%s443 + $0x20] sm:$0xf]
    %v1130 = vld [vmem:[%s443 + $0x24] sm:$0xf]
    %v1131 = vld [vmem:[%s443 + $0x28] sm:$0xf]
    %v1132 = vld [vmem:[%s443 + $0x2c] sm:$0xf]
    %v1133 = vld [vmem:[%s443 + $0x30] sm:$0xf]
    %v1134 = vld [vmem:[%s443 + $0x34] sm:$0xf]
    %v1135 = vld [vmem:[%s443 + $0x38] sm:$0xf]
    %v1136 = vld [vmem:[%s443 + $0x3c] sm:$0xf]
    %v1153 = vunpack.c.l.b16 %v1121
    %v1154 = vunpack.c.l.b16 %v1122
    %v1155 = vunpack.c.l.b16 %v1123
    %v1156 = vunpack.c.l.b16 %v1124
    %v1157 = vunpack.c.l.b16 %v1125
    %v1158 = vunpack.c.l.b16 %v1126
    %v1159 = vunpack.c.l.b16 %v1127
    %v1160 = vunpack.c.l.b16 %v1128
    %v1161 = vunpack.c.l.b16 %v1129
    %v1162 = vunpack.c.l.b16 %v1130
    %v1163 = vunpack.c.l.b16 %v1131
    %v1164 = vunpack.c.l.b16 %v1132
    %v1165 = vunpack.c.l.b16 %v1133
    %v1166 = vunpack.c.l.b16 %v1134
    %v1167 = vunpack.c.l.b16 %v1135
    %v1168 = vunpack.c.l.b16 %v1136
    %v1169 = vpack.c.b16 %v1154, %v1153
    %v1170 = vpack.c.b16 %v1156, %v1155
    %v1171 = vpack.c.b16 %v1158, %v1157
    %v1172 = vpack.c.b16 %v1160, %v1159
    %v1173 = vpack.c.b16 %v1162, %v1161
    %v1174 = vpack.c.b16 %v1164, %v1163
    %v1175 = vpack.c.b16 %v1166, %v1165
    %v1176 = vpack.c.b16 %v1168, %v1167
    %1185 = vmatprep.subr.bf16.mxu0 0
    %1186 = vmatpush1.bf16.msra.mxu0 %v1176
    %1187 = vmatprep.subr.bf16.mxu0 0
    %1188 = vmatpush1.bf16.msra.mxu0 %v1175
    %1189 = vmatprep.subr.bf16.mxu0 0
    %1190 = vmatpush1.bf16.msra.mxu0 %v1174
    %1191 = vmatprep.subr.bf16.mxu0 0
    %1192 = vmatpush1.bf16.msra.mxu0 %v1173
    %1193 = vmatprep.subr.bf16.mxu0 0
    %1194 = vmatpush1.bf16.msra.mxu0 %v1172
    %1195 = vmatprep.subr.bf16.mxu0 0
    %1196 = vmatpush1.bf16.msra.mxu0 %v1171
    %1197 = vmatprep.subr.bf16.mxu0 0
    %1198 = vmatpush1.bf16.msra.mxu0 %v1170
    %1199 = vmatprep.subr.bf16.mxu0 0
    %1200 = vmatpush1.bf16.msra.mxu0 %v1169
    %1201 = vmatprep.subr.bf16.mxu0 0
    %1202 = vmatpush2.bf16.msra.mxu0 0
    %1203 = vmatprep.subr.bf16.mxu0 0
    %1204 = vmatpush2.bf16.msra.mxu0 0
    %1205 = vmatprep.subr.bf16.mxu0 0
    %1206 = vmatpush2.bf16.msra.mxu0 0
    %1207 = vmatprep.subr.bf16.mxu0 0
    %1208 = vmatpush2.bf16.msra.mxu0 0
    %1209 = vmatprep.subr.bf16.mxu0 0
    %1210 = vmatpush2.bf16.msra.mxu0 0
    %1211 = vmatprep.subr.bf16.mxu0 0
    %1212 = vmatpush2.bf16.msra.mxu0 0
    %1213 = vmatprep.subr.bf16.mxu0 0
    %1214 = vmatpush2.bf16.msra.mxu0 0
    %1215 = vmatprep.subr.bf16.mxu0 0
    %1216 = vmatpush2.bf16.msra.mxu0 0
    %1217 = vmatprep.mubr.bf16.mxu0 0
    %1218 = vmatmul.mubr.bf16.gmra.mxu0 %v1070
    %v1219 = vpop.f32.mrf.mxu0
    %v1220 = vadd.f32 0.0, %v1219
    %v1221 = vpop.f32.mrf.mxu0
    %v1222 = vpop.f32.mrf.mxu0
    %v1223 = vadd.f32 0.0, %v1222
    %v1224 = vpop.f32.mrf.mxu0
    %1225 = vdwg.mxu0
    %v1228 = vunpack.c.l.b16 %v1103
    %v1229 = vunpack.c.l.b16 %v1104
    %v1230 = vpack.c.b16 %v1229, %v1228
    %v1248 = vunpack.c.l.b16 %v1105
    %v1249 = vunpack.c.l.b16 %v1106
    %v1250 = vunpack.c.l.b16 %v1107
    %v1251 = vunpack.c.l.b16 %v1108
    %v1252 = vunpack.c.l.b16 %v1109
    %v1253 = vunpack.c.l.b16 %v1110
    %v1254 = vunpack.c.l.b16 %v1111
    %v1255 = vunpack.c.l.b16 %v1112
    %v1256 = vunpack.c.l.b16 %v1113
    %v1257 = vunpack.c.l.b16 %v1114
    %v1258 = vunpack.c.l.b16 %v1115
    %v1259 = vunpack.c.l.b16 %v1116
    %v1260 = vunpack.c.l.b16 %v1117
    %v1261 = vunpack.c.l.b16 %v1118
    %v1262 = vunpack.c.l.b16 %v1119
    %v1263 = vunpack.c.l.b16 %v1120
    %v1264 = vpack.c.b16 %v1249, %v1248
    %v1265 = vpack.c.b16 %v1251, %v1250
    %v1266 = vpack.c.b16 %v1253, %v1252
    %v1267 = vpack.c.b16 %v1255, %v1254
    %v1268 = vpack.c.b16 %v1257, %v1256
    %v1269 = vpack.c.b16 %v1259, %v1258
    %v1270 = vpack.c.b16 %v1261, %v1260
    %v1271 = vpack.c.b16 %v1263, %v1262
    %1280 = vmatprep.subr.bf16.mxu0 0
    %1281 = vmatpush1.bf16.msra.mxu0 %v1271
    %1282 = vmatprep.subr.bf16.mxu0 0
    %1283 = vmatpush1.bf16.msra.mxu0 %v1270
    %1284 = vmatprep.subr.bf16.mxu0 0
    %1285 = vmatpush1.bf16.msra.mxu0 %v1269
    %1286 = vmatprep.subr.bf16.mxu0 0
    %1287 = vmatpush1.bf16.msra.mxu0 %v1268
    %1288 = vmatprep.subr.bf16.mxu0 0
    %1289 = vmatpush1.bf16.msra.mxu0 %v1267
    %1290 = vmatprep.subr.bf16.mxu0 0
    %1291 = vmatpush1.bf16.msra.mxu0 %v1266
    %1292 = vmatprep.subr.bf16.mxu0 0
    %1293 = vmatpush1.bf16.msra.mxu0 %v1265
    %1294 = vmatprep.subr.bf16.mxu0 0
    %1295 = vmatpush1.bf16.msra.mxu0 %v1264
    %1296 = vmatprep.subr.bf16.mxu0 0
    %1297 = vmatpush2.bf16.msra.mxu0 0
    %1298 = vmatprep.subr.bf16.mxu0 0
    %1299 = vmatpush2.bf16.msra.mxu0 0
    %1300 = vmatprep.subr.bf16.mxu0 0
    %1301 = vmatpush2.bf16.msra.mxu0 0
    %1302 = vmatprep.subr.bf16.mxu0 0
    %1303 = vmatpush2.bf16.msra.mxu0 0
    %1304 = vmatprep.subr.bf16.mxu0 0
    %1305 = vmatpush2.bf16.msra.mxu0 0
    %1306 = vmatprep.subr.bf16.mxu0 0
    %1307 = vmatpush2.bf16.msra.mxu0 0
    %1308 = vmatprep.subr.bf16.mxu0 0
    %1309 = vmatpush2.bf16.msra.mxu0 0
    %1310 = vmatprep.subr.bf16.mxu0 0
    %1311 = vmatpush2.bf16.msra.mxu0 0
    %1312 = vmatprep.mubr.bf16.mxu0 0
    %1313 = vmatmul.mubr.bf16.gmra.mxu0 %v1230
    %v1314 = vpop.f32.mrf.mxu0
    %v1315 = vadd.f32 %v1220, %v1314
    %v1316 = vpop.f32.mrf.mxu0
    %v1317 = vpop.f32.mrf.mxu0
    %v1318 = vadd.f32 %v1223, %v1317
    %v1319 = vpop.f32.mrf.mxu0
    %1320 = vdwg.mxu0
    %v1321 = vld [vmem:[#allocation3] sm:$0xe]
    %v1322 = vld [vmem:[#allocation3 + $0x4] sm:$0xf]
    %v1323 = vld [vmem:[#allocation3 + $0x8] sm:$0x1]
    %v1324 = vld [vmem:[%s647] sm:$0xf]
    %v1325 = vld [vmem:[%s647 + $0x4] sm:$0xf]
    %v1326 = vld [vmem:[%s647 + $0x8] sm:$0xf]
    %v1327 = vld [vmem:[%s647 + $0xc] sm:$0xf]
    %v1328 = vld [vmem:[%s647 + $0x10] sm:$0xf]
    %v1329 = vld [vmem:[%s647 + $0x14] sm:$0xf]
    %v1330 = vld [vmem:[%s647 + $0x18] sm:$0xf]
    %v1331 = vld [vmem:[%s647 + $0x1c] sm:$0xf]
    %v1332 = vld [vmem:[%s647 + $0x20] sm:$0xf]
    %v1333 = vld [vmem:[%s647 + $0x24] sm:$0xf]
    %v1334 = vld [vmem:[%s647 + $0x28] sm:$0xf]
    %v1335 = vld [vmem:[%s647 + $0x2c] sm:$0xf]
    %v1336 = vld [vmem:[%s647 + $0x30] sm:$0xf]
    %v1337 = vld [vmem:[%s647 + $0x34] sm:$0xf]
    %v1338 = vld [vmem:[%s647 + $0x38] sm:$0xf]
    %v1339 = vld [vmem:[%s647 + $0x3c] sm:$0xf]
    %v1343 = vunpack.c.l.b16 %v1321
    %v1344 = vunpack.c.l.b16 %v1322
    %v1345 = vunpack.c.l.b16 %v1323
    %v1346 = vpack.c.b16 %v1344, %v1343
    %v1347 = vpack.c.b16 %v1345, %v1345
    %v1348 = vrot.slane %v1346, 1
    %v1349 = vrot.slane %v1347, 1
    %v1350 = vsel %vm306, %v1348, %v1349
    %v1368 = vunpack.c.l.b16 %v1324
    %v1369 = vunpack.c.l.b16 %v1325
    %v1370 = vunpack.c.l.b16 %v1326
    %v1371 = vunpack.c.l.b16 %v1327
    %v1372 = vunpack.c.l.b16 %v1328
    %v1373 = vunpack.c.l.b16 %v1329
    %v1374 = vunpack.c.l.b16 %v1330
    %v1375 = vunpack.c.l.b16 %v1331
    %v1376 = vunpack.c.l.b16 %v1332
    %v1377 = vunpack.c.l.b16 %v1333
    %v1378 = vunpack.c.l.b16 %v1334
    %v1379 = vunpack.c.l.b16 %v1335
    %v1380 = vunpack.c.l.b16 %v1336
    %v1381 = vunpack.c.l.b16 %v1337
    %v1382 = vunpack.c.l.b16 %v1338
    %v1383 = vunpack.c.l.b16 %v1339
    %v1384 = vpack.c.b16 %v1369, %v1368
    %v1385 = vpack.c.b16 %v1371, %v1370
    %v1386 = vpack.c.b16 %v1373, %v1372
    %v1387 = vpack.c.b16 %v1375, %v1374
    %v1388 = vpack.c.b16 %v1377, %v1376
    %v1389 = vpack.c.b16 %v1379, %v1378
    %v1390 = vpack.c.b16 %v1381, %v1380
    %v1391 = vpack.c.b16 %v1383, %v1382
    %1400 = vmatprep.subr.bf16.mxu0 0
    %1401 = vmatpush1.bf16.msra.mxu0 %v1391
    %1402 = vmatprep.subr.bf16.mxu0 0
    %1403 = vmatpush1.bf16.msra.mxu0 %v1390
    %1404 = vmatprep.subr.bf16.mxu0 0
    %1405 = vmatpush1.bf16.msra.mxu0 %v1389
    %1406 = vmatprep.subr.bf16.mxu0 0
    %1407 = vmatpush1.bf16.msra.mxu0 %v1388
    %1408 = vmatprep.subr.bf16.mxu0 0
    %1409 = vmatpush1.bf16.msra.mxu0 %v1387
    %1410 = vmatprep.subr.bf16.mxu0 0
    %1411 = vmatpush1.bf16.msra.mxu0 %v1386
    %1412 = vmatprep.subr.bf16.mxu0 0
    %1413 = vmatpush1.bf16.msra.mxu0 %v1385
    %1414 = vmatprep.subr.bf16.mxu0 0
    %1415 = vmatpush1.bf16.msra.mxu0 %v1384
    %1416 = vmatprep.subr.bf16.mxu0 0
    %1417 = vmatpush2.bf16.msra.mxu0 0
    %1418 = vmatprep.subr.bf16.mxu0 0
    %1419 = vmatpush2.bf16.msra.mxu0 0
    %1420 = vmatprep.subr.bf16.mxu0 0
    %1421 = vmatpush2.bf16.msra.mxu0 0
    %1422 = vmatprep.subr.bf16.mxu0 0
    %1423 = vmatpush2.bf16.msra.mxu0 0
    %1424 = vmatprep.subr.bf16.mxu0 0
    %1425 = vmatpush2.bf16.msra.mxu0 0
    %1426 = vmatprep.subr.bf16.mxu0 0
    %1427 = vmatpush2.bf16.msra.mxu0 0
    %1428 = vmatprep.subr.bf16.mxu0 0
    %1429 = vmatpush2.bf16.msra.mxu0 0
    %1430 = vmatprep.subr.bf16.mxu0 0
    %1431 = vmatpush2.bf16.msra.mxu0 0
    %1432 = vmatprep.mubr.bf16.mxu0 0
    %1433 = vmatmul.mubr.bf16.gmra.mxu0 %v1350
    %v1434 = vpop.f32.mrf.mxu0
    %v1435 = vadd.f32 0.0, %v1434
    %v1436 = vpop.f32.mrf.mxu0
    %v1437 = vpop.f32.mrf.mxu0
    %v1438 = vadd.f32 0.0, %v1437
    %v1439 = vpop.f32.mrf.mxu0
    %1440 = vdwg.mxu0
    %v1441 = vadd.f32 %v1315, %v1435
    %v1442 = vadd.f32 %v1318, %v1438
    %v1443 = vadd.f32 %v1441, %v771
    %v1444 = vadd.f32 %v1442, %v771
    %v1445 = vmax.f32 %v1443, 0.0
    %v1446 = vmax.f32 %v1444, 0.0
    %s1447 = scalar_lea.vmem [#allocation10], 16
    %1448 = vst [vmem:[%s1447] sm:$0xff] %v1445
    %1449 = vst [vmem:[%s1447 + $0x8] sm:$0xff] %v1446
    // Predicated region
    $region34: #{encoder_block_forward_rows.1} parent=1 // pred_check
      _
    $region35: #{encoder_block_forward_rows.1} parent=1 // pred_check_branch
      %1451 = sbr.rel (0) target = $region37
    $region36: #{encoder_block_forward_rows.1} parent=1 // pred_region
      %s1453 = ssub.s32 512, 512
      %1454 = vsyncadd [#allocation6], %s1453
      %s1455 = sshll.u32 [#allocation10], 4
      %s1456 = int_to_ptr.vmem [resolvable:$true] %s1455
      %1461 = dma.vmem_to_hbm [thread:$0]  %s1456, 512, %s5, [#allocation6], 128, 128, 8
    $region37: #{encoder_block_forward_rows.1} parent=1 // pred_fallthru
      _
    // Predicated region
    $region38: #{encoder_block_forward_rows.1} parent=1 // pred_check
      _
    $region39: #{encoder_block_forward_rows.1} parent=1 // pred_check_branch
      %1463 = sbr.rel (0) target = $region41
    $region40: #{encoder_block_forward_rows.1} parent=1 // pred_region
      %1464 = dma.done [#allocation6], 512
    $region41: #{encoder_block_forward_rows.1} parent=1 // pred_fallthru
      _
    %1465 = vsyncpa [#allocation5], 1
    %1466 = vsyncpa [#allocation8], 1
    %1467 = vsyncpa [#allocation6], 1

</llo_original>
